<compile_context>
chip_gen: v7x
topology: tpu7x:2x2x1
jax: 0.10.0
libtpu: 0.0.40
codegen_flags: <defaults>
</compile_context>

<pallas_src>
import functools

import jax
import jax.numpy as jnp
from jax.experimental import pallas as pl
from jax.experimental.pallas import tpu as pltpu


def _rec_kernel(w_lm_ref, w_pan_ref, x_ref, cd_ref, lm_ref, pan_ref, xpad_ref,
                *, C, H, W, Ho, Wo, Pn, d, o):
    """One batch item per grid step: fused depthwise-3x3-conv + bilinear /d
    (LM branch) and 1x1 conv (PAN branch), all channels in-block."""
    # Zero the padded scratch; only the interior is rewritten per channel, so
    # the border rows/cols stay zero (= the conv's zero padding).
    xpad_ref[...] = jnp.zeros_like(xpad_ref)

    cd = cd_ref[...]                                       # (W, Wo) bf16, 0/0.5

    pan_acc = [jnp.zeros((H, W), jnp.float32) for _ in range(Pn)]

    for c in range(C):
        xc = x_ref[0, c]                                   # (H, W), read once
        xpad_ref[1:H + 1, 1:W + 1] = xc                    # in-kernel zero pad

        # ---- PAN 1x1 conv: accumulate in values, single store at the end.
        for p in range(Pn):
            pan_acc[p] = pan_acc[p] + w_pan_ref[p * C + c] * xc

        # ---- LM branch.
        # Bilinear /d (align_corners=False, H%d==0) averages y-rows
        # {d*io+o, d*io+o+1}.  Fold that into strided sublane reads of the
        # padded scratch so the conv only touches the Ho output rows.
        u = [xpad_ref[pl.ds(o + a, Ho, stride=d), :] for a in range(4)]

        t = None                                           # (Ho, W) conv+row-avg
        for kh in range(3):
            v = 0.5 * (u[kh] + u[kh + 1])                  # (Ho, W+2)
            for kw in range(3):
                term = w_lm_ref[c * 9 + 3 * kh + kw] * v[:, kw:kw + W]
                t = term if t is None else t + term

        # Column 0.5/0.5 average as a tiny MXU matmul.  Split the f32 operand
        # into two bf16 pieces (cd is exact in bf16) so the product is exact
        # to ~1e-6 independent of the MXU's f32 pass count.
        t_hi = t.astype(jnp.bfloat16)
        t_lo = (t - t_hi.astype(jnp.float32)).astype(jnp.bfloat16)
        lm_c = (jnp.dot(t_hi, cd, preferred_element_type=jnp.float32)
                + jnp.dot(t_lo, cd, preferred_element_type=jnp.float32))
        lm_ref[0, c] = lm_c                                # (Ho, Wo)

    for p in range(Pn):
        pan_ref[0, p] = pan_acc[p]                         # one store, no RMW


def rec_convnet_forward(x, w_dw, w_pan, *, downscale=4):
    """REC_CONVNet forward.  x: (N, C, H, W); w_dw: (C, 1, 3, 3) depthwise
    weights; w_pan: (Pn, C, 1, 1) 1x1-conv weights.  Returns (lm_rec, pan_rec)
    in NCHW, matching the PyTorch module."""
    assert downscale in (2, 4)
    N, C, H, W = x.shape
    d = downscale
    assert H % d == 0 and W % d == 0
    Ho, Wo = H // d, W // d
    Pn = w_pan.shape[0]
    o = 0 if d == 2 else 1        # first source row/col of the 2-tap average

    x = x.astype(jnp.float32)
    w_lm_flat = w_dw.reshape(C * 9).astype(jnp.float32)       # 1D SMEM table
    w_pan_flat = w_pan.reshape(Pn * C).astype(jnp.float32)    # 1D SMEM table

    # Column two-tap bilinear selection matrix (entries 0 / 0.5, exact in bf16).
    jcol = jnp.arange(W)[:, None]
    jsel = d * jnp.arange(Wo)[None, :] + o
    cd = (0.5 * ((jcol == jsel) | (jcol == jsel + 1)).astype(jnp.float32)
          ).astype(jnp.bfloat16)                              # (W, Wo)

    kernel = functools.partial(_rec_kernel, C=C, H=H, W=W, Ho=Ho, Wo=Wo,
                               Pn=Pn, d=d, o=o)

    flops = N * C * (18 * Ho * W + 4 * Ho * W * Wo + 2 * Pn * H * W)
    bytes_accessed = (4 * (N * C * H * W + N * C * Ho * Wo + N * Pn * H * W
                           + C * (9 + Pn)) + 2 * W * Wo)

    lm, pan = pl.pallas_call(
        kernel,
        out_shape=(
            jax.ShapeDtypeStruct((N, C, Ho, Wo), jnp.float32),   # lm_rec
            jax.ShapeDtypeStruct((N, Pn, H, W), jnp.float32),    # pan_rec
        ),
        grid=(N,),
        in_specs=[
            pl.BlockSpec(memory_space=pltpu.MemorySpace.SMEM),        # w_lm
            pl.BlockSpec(memory_space=pltpu.MemorySpace.SMEM),        # w_pan
            pl.BlockSpec((1, C, H, W), lambda n: (n, 0, 0, 0)),       # x
            pl.BlockSpec((W, Wo), lambda n: (0, 0)),                  # cd (resident)
        ],
        out_specs=(
            pl.BlockSpec((1, C, Ho, Wo), lambda n: (n, 0, 0, 0)),     # lm
            pl.BlockSpec((1, Pn, H, W), lambda n: (n, 0, 0, 0)),      # pan
        ),
        scratch_shapes=[pltpu.VMEM((H + 2, W + 2), jnp.float32)],
        compiler_params=pltpu.CompilerParams(
            dimension_semantics=("parallel",)),
        cost_estimate=pl.CostEstimate(flops=flops, transcendentals=0,
                                      bytes_accessed=bytes_accessed),
    )(w_lm_flat, w_pan_flat, x, cd)
    return lm, pan


def _reference_forward(x, w_dw, w_pan, downscale):
    """Plain-XLA reference (same semantics) used only for a sanity check."""
    C = x.shape[1]
    y = jax.lax.conv_general_dilated(
        x, w_dw, window_strides=(1, 1), padding=((1, 1), (1, 1)),
        dimension_numbers=("NCHW", "OIHW", "NCHW"), feature_group_count=C,
        precision=jax.lax.Precision.HIGHEST)
    d = downscale
    o = 0 if d == 2 else 1
    lm = 0.25 * (y[:, :, o::d, o::d] + y[:, :, o::d, o + 1::d]
                 + y[:, :, o + 1::d, o::d] + y[:, :, o + 1::d, o + 1::d])
    pan = jnp.einsum("nchw,pc->nphw", x, w_pan.reshape(w_pan.shape[0], C),
                     precision=jax.lax.Precision.HIGHEST)
    return lm, pan


if __name__ == "__main__":
    LM_NC, PAN_NC, BATCH, SPATIAL = 4, 1, 2, 16

    key = jax.random.PRNGKey(0)
    kx, kw1, kw2 = jax.random.split(key, 3)
    x = jax.random.normal(kx, (BATCH, LM_NC, SPATIAL, SPATIAL), jnp.float32)
    w_dw = 0.2 * jax.random.normal(kw1, (LM_NC, 1, 3, 3), jnp.float32)
    w_pan = 0.5 * jax.random.normal(kw2, (PAN_NC, LM_NC, 1, 1), jnp.float32)

    for ds in (4, 2):
        fwd = jax.jit(functools.partial(rec_convnet_forward, downscale=ds))
        lm, pan = fwd(x, w_dw, w_pan)
        jax.block_until_ready((lm, pan))

        assert lm.shape == (BATCH, LM_NC, SPATIAL // ds, SPATIAL // ds)
        assert pan.shape == (BATCH, PAN_NC, SPATIAL, SPATIAL)

        lm_ref, pan_ref = _reference_forward(x, w_dw, w_pan, ds)
        assert float(jnp.max(jnp.abs(lm - lm_ref))) < 1e-4, (
            f"LM branch mismatch (downscale={ds})")
        assert float(jnp.max(jnp.abs(pan - pan_ref))) < 1e-4, (
            f"PAN branch mismatch (downscale={ds})")

    print("KERNEL_OK")
</pallas_src>

<mosaic_0001>
module attributes {stable_mosaic.version = 11 : i64} {
  func.func @_rec_kernel(%arg0: i32, %arg1: memref<36xf32, #tpu.memory_space<smem>>, %arg2: memref<4xf32, #tpu.memory_space<smem>>, %arg3: memref<1x4x16x16xf32, #tpu.memory_space<vmem>>, %arg4: memref<16x4xbf16, #tpu.memory_space<vmem>>, %arg5: memref<1x4x4x4xf32, #tpu.memory_space<vmem>>, %arg6: memref<1x1x16x16xf32, #tpu.memory_space<vmem>>, %arg7: memref<18x18xf32, #tpu.memory_space<vmem>>) attributes {dimension_semantics = [#tpu.dimension_semantics<parallel>], iteration_bounds = array<i64: 2>, scalar_prefetch = 0 : i64, scratch_operands = 1 : i64, tpu.core_type = #tpu.core_type<tc>, window_params = [{transform_indices = @transform_0, window_bounds = array<i64: 36>}, {transform_indices = @transform_1, window_bounds = array<i64: 4>}, {transform_indices = @transform_2, window_bounds = array<i64: 1, 4, 16, 16>}, {pipeline_mode = #tpu.pipeline_mode<synchronous>, transform_indices = @transform_3, window_bounds = array<i64: 16, 4>}, {transform_indices = @transform_4, window_bounds = array<i64: 1, 4, 4, 4>}, {transform_indices = @transform_5, window_bounds = array<i64: 1, 1, 16, 16>}]} {
    %cst = arith.constant 0.000000e+00 : f32
    %0 = vector.broadcast %cst : f32 to vector<18x18xf32>
    %c0 = arith.constant 0 : index
    %c0_0 = arith.constant 0 : index
    %1 = vector.load %arg7[%c0, %c0_0] : memref<18x18xf32, #tpu.memory_space<vmem>>, vector<18x18xf32>
    tpu.vector_store %arg7[%c0, %c0_0], %0 {strides = array<i32>} : memref<18x18xf32, #tpu.memory_space<vmem>>, vector<18x18xf32>,
    %c0_1 = arith.constant 0 : index
    %c0_2 = arith.constant 0 : index
    %2 = vector.load %arg4[%c0_1, %c0_2] : memref<16x4xbf16, #tpu.memory_space<vmem>>, vector<16x4xbf16>
    %cst_3 = arith.constant 0.000000e+00 : f32
    %3 = vector.broadcast %cst_3 : f32 to vector<16x16xf32>
    %c0_4 = arith.constant 0 : index
    %c0_5 = arith.constant 0 : index
    %c0_6 = arith.constant 0 : index
    %c0_7 = arith.constant 0 : index
    %4 = vector.load %arg3[%c0_4, %c0_5, %c0_6, %c0_7] : memref<1x4x16x16xf32, #tpu.memory_space<vmem>>, vector<1x1x16x16xf32>
    %5 = vector.shape_cast %4 : vector<1x1x16x16xf32> to vector<16x16xf32>
    %c1 = arith.constant 1 : index
    %c1_8 = arith.constant 1 : index
    %6 = vector.load %arg7[%c1, %c1_8] : memref<18x18xf32, #tpu.memory_space<vmem>>, vector<16x16xf32>
    tpu.vector_store %arg7[%c1, %c1_8], %5 {strides = array<i32>} : memref<18x18xf32, #tpu.memory_space<vmem>>, vector<16x16xf32>,
    %c0_9 = arith.constant 0 : index
    %7 = memref.load %arg2[%c0_9] : memref<4xf32, #tpu.memory_space<smem>>
    %8 = vector.broadcast %7 : f32 to vector<16x16xf32>
    %9 = arith.mulf %8, %5 : vector<16x16xf32>
    %10 = arith.addf %3, %9 : vector<16x16xf32>
    %c1_10 = arith.constant 1 : index
    %c0_11 = arith.constant 0 : index
    %11 = tpu.strided_load %arg7[%c1_10, %c0_11] {strides = array<i32: 4, 1>} : memref<18x18xf32, #tpu.memory_space<vmem>>, vector<4x18xf32>
    %c2 = arith.constant 2 : index
    %c0_12 = arith.constant 0 : index
    %12 = tpu.strided_load %arg7[%c2, %c0_12] {strides = array<i32: 4, 1>} : memref<18x18xf32, #tpu.memory_space<vmem>>, vector<4x18xf32>
    %c3 = arith.constant 3 : index
    %c0_13 = arith.constant 0 : index
    %13 = tpu.strided_load %arg7[%c3, %c0_13] {strides = array<i32: 4, 1>} : memref<18x18xf32, #tpu.memory_space<vmem>>, vector<4x18xf32>
    %c4 = arith.constant 4 : index
    %c0_14 = arith.constant 0 : index
    %14 = tpu.strided_load %arg7[%c4, %c0_14] {strides = array<i32: 4, 1>} : memref<18x18xf32, #tpu.memory_space<vmem>>, vector<4x18xf32>
    %15 = arith.addf %11, %12 : vector<4x18xf32>
    %cst_15 = arith.constant 5.000000e-01 : f32
    %16 = vector.broadcast %cst_15 : f32 to vector<4x18xf32>
    %17 = arith.mulf %16, %15 : vector<4x18xf32>
    %c0_16 = arith.constant 0 : index
    %18 = memref.load %arg1[%c0_16] : memref<36xf32, #tpu.memory_space<smem>>
    %19 = vector.extract_strided_slice %17 {offsets = [0, 0], sizes = [4, 16], strides = [1, 1]} : vector<4x18xf32> to vector<4x16xf32>
    %20 = vector.broadcast %18 : f32 to vector<4x16xf32>
    %21 = arith.mulf %20, %19 : vector<4x16xf32>
    %c1_17 = arith.constant 1 : index
    %22 = memref.load %arg1[%c1_17] : memref<36xf32, #tpu.memory_space<smem>>
    %23 = vector.extract_strided_slice %17 {offsets = [0, 1], sizes = [4, 16], strides = [1, 1]} : vector<4x18xf32> to vector<4x16xf32>
    %24 = vector.broadcast %22 : f32 to vector<4x16xf32>
    %25 = arith.mulf %24, %23 : vector<4x16xf32>
    %26 = arith.addf %21, %25 : vector<4x16xf32>
    %c2_18 = arith.constant 2 : index
    %27 = memref.load %arg1[%c2_18] : memref<36xf32, #tpu.memory_space<smem>>
    %28 = vector.extract_strided_slice %17 {offsets = [0, 2], sizes = [4, 16], strides = [1, 1]} : vector<4x18xf32> to vector<4x16xf32>
    %29 = vector.broadcast %27 : f32 to vector<4x16xf32>
    %30 = arith.mulf %29, %28 : vector<4x16xf32>
    %31 = arith.addf %26, %30 : vector<4x16xf32>
    %32 = arith.addf %12, %13 : vector<4x18xf32>
    %cst_19 = arith.constant 5.000000e-01 : f32
    %33 = vector.broadcast %cst_19 : f32 to vector<4x18xf32>
    %34 = arith.mulf %33, %32 : vector<4x18xf32>
    %c3_20 = arith.constant 3 : index
    %35 = memref.load %arg1[%c3_20] : memref<36xf32, #tpu.memory_space<smem>>
    %36 = vector.extract_strided_slice %34 {offsets = [0, 0], sizes = [4, 16], strides = [1, 1]} : vector<4x18xf32> to vector<4x16xf32>
    %37 = vector.broadcast %35 : f32 to vector<4x16xf32>
    %38 = arith.mulf %37, %36 : vector<4x16xf32>
    %39 = arith.addf %31, %38 : vector<4x16xf32>
    %c4_21 = arith.constant 4 : index
    %40 = memref.load %arg1[%c4_21] : memref<36xf32, #tpu.memory_space<smem>>
    %41 = vector.extract_strided_slice %34 {offsets = [0, 1], sizes = [4, 16], strides = [1, 1]} : vector<4x18xf32> to vector<4x16xf32>
    %42 = vector.broadcast %40 : f32 to vector<4x16xf32>
    %43 = arith.mulf %42, %41 : vector<4x16xf32>
    %44 = arith.addf %39, %43 : vector<4x16xf32>
    %c5 = arith.constant 5 : index
    %45 = memref.load %arg1[%c5] : memref<36xf32, #tpu.memory_space<smem>>
    %46 = vector.extract_strided_slice %34 {offsets = [0, 2], sizes = [4, 16], strides = [1, 1]} : vector<4x18xf32> to vector<4x16xf32>
    %47 = vector.broadcast %45 : f32 to vector<4x16xf32>
    %48 = arith.mulf %47, %46 : vector<4x16xf32>
    %49 = arith.addf %44, %48 : vector<4x16xf32>
    %50 = arith.addf %13, %14 : vector<4x18xf32>
    %cst_22 = arith.constant 5.000000e-01 : f32
    %51 = vector.broadcast %cst_22 : f32 to vector<4x18xf32>
    %52 = arith.mulf %51, %50 : vector<4x18xf32>
    %c6 = arith.constant 6 : index
    %53 = memref.load %arg1[%c6] : memref<36xf32, #tpu.memory_space<smem>>
    %54 = vector.extract_strided_slice %52 {offsets = [0, 0], sizes = [4, 16], strides = [1, 1]} : vector<4x18xf32> to vector<4x16xf32>
    %55 = vector.broadcast %53 : f32 to vector<4x16xf32>
    %56 = arith.mulf %55, %54 : vector<4x16xf32>
    %57 = arith.addf %49, %56 : vector<4x16xf32>
    %c7 = arith.constant 7 : index
    %58 = memref.load %arg1[%c7] : memref<36xf32, #tpu.memory_space<smem>>
    %59 = vector.extract_strided_slice %52 {offsets = [0, 1], sizes = [4, 16], strides = [1, 1]} : vector<4x18xf32> to vector<4x16xf32>
    %60 = vector.broadcast %58 : f32 to vector<4x16xf32>
    %61 = arith.mulf %60, %59 : vector<4x16xf32>
    %62 = arith.addf %57, %61 : vector<4x16xf32>
    %c8 = arith.constant 8 : index
    %63 = memref.load %arg1[%c8] : memref<36xf32, #tpu.memory_space<smem>>
    %64 = vector.extract_strided_slice %52 {offsets = [0, 2], sizes = [4, 16], strides = [1, 1]} : vector<4x18xf32> to vector<4x16xf32>
    %65 = vector.broadcast %63 : f32 to vector<4x16xf32>
    %66 = arith.mulf %65, %64 : vector<4x16xf32>
    %67 = arith.addf %62, %66 : vector<4x16xf32>
    %68 = arith.truncf %67 : vector<4x16xf32> to vector<4x16xbf16>
    %69 = arith.extf %68 : vector<4x16xbf16> to vector<4x16xf32>
    %70 = arith.subf %67, %69 : vector<4x16xf32>
    %71 = arith.truncf %70 : vector<4x16xf32> to vector<4x16xbf16>
    %cst_23 = arith.constant dense<0.000000e+00> : vector<4x4xf32>
    %72 = tpu.matmul %68, %2, %cst_23 {dimension_numbers = #tpu.dot_dimension_numbers<[1], [0], [0], [1], [0, 0, 1, 1], [], []>} : vector<4x16xbf16>, vector<16x4xbf16>, vector<4x4xf32> -> vector<4x4xf32>
    %cst_24 = arith.constant dense<0.000000e+00> : vector<4x4xf32>
    %73 = tpu.matmul %71, %2, %cst_24 {dimension_numbers = #tpu.dot_dimension_numbers<[1], [0], [0], [1], [0, 0, 1, 1], [], []>} : vector<4x16xbf16>, vector<16x4xbf16>, vector<4x4xf32> -> vector<4x4xf32>
    %74 = arith.addf %72, %73 : vector<4x4xf32>
    %c0_25 = arith.constant 0 : index
    %c0_26 = arith.constant 0 : index
    %c0_27 = arith.constant 0 : index
    %c0_28 = arith.constant 0 : index
    %75 = vector.load %arg5[%c0_25, %c0_26, %c0_27, %c0_28] : memref<1x4x4x4xf32, #tpu.memory_space<vmem>>, vector<1x1x4x4xf32>
    %76 = vector.shape_cast %75 : vector<1x1x4x4xf32> to vector<4x4xf32>
    %77 = vector.shape_cast %74 : vector<4x4xf32> to vector<1x1x4x4xf32>
    tpu.vector_store %arg5[%c0_25, %c0_26, %c0_27, %c0_28], %77 {strides = array<i32>} : memref<1x4x4x4xf32, #tpu.memory_space<vmem>>, vector<1x1x4x4xf32>,
    %c0_29 = arith.constant 0 : index
    %c1_30 = arith.constant 1 : index
    %c0_31 = arith.constant 0 : index
    %c0_32 = arith.constant 0 : index
    %78 = vector.load %arg3[%c0_29, %c1_30, %c0_31, %c0_32] : memref<1x4x16x16xf32, #tpu.memory_space<vmem>>, vector<1x1x16x16xf32>
    %79 = vector.shape_cast %78 : vector<1x1x16x16xf32> to vector<16x16xf32>
    %c1_33 = arith.constant 1 : index
    %c1_34 = arith.constant 1 : index
    %80 = vector.load %arg7[%c1_33, %c1_34] : memref<18x18xf32, #tpu.memory_space<vmem>>, vector<16x16xf32>
    tpu.vector_store %arg7[%c1_33, %c1_34], %79 {strides = array<i32>} : memref<18x18xf32, #tpu.memory_space<vmem>>, vector<16x16xf32>,
    %c1_35 = arith.constant 1 : index
    %81 = memref.load %arg2[%c1_35] : memref<4xf32, #tpu.memory_space<smem>>
    %82 = vector.broadcast %81 : f32 to vector<16x16xf32>
    %83 = arith.mulf %82, %79 : vector<16x16xf32>
    %84 = arith.addf %10, %83 : vector<16x16xf32>
    %c1_36 = arith.constant 1 : index
    %c0_37 = arith.constant 0 : index
    %85 = tpu.strided_load %arg7[%c1_36, %c0_37] {strides = array<i32: 4, 1>} : memref<18x18xf32, #tpu.memory_space<vmem>>, vector<4x18xf32>
    %c2_38 = arith.constant 2 : index
    %c0_39 = arith.constant 0 : index
    %86 = tpu.strided_load %arg7[%c2_38, %c0_39] {strides = array<i32: 4, 1>} : memref<18x18xf32, #tpu.memory_space<vmem>>, vector<4x18xf32>
    %c3_40 = arith.constant 3 : index
    %c0_41 = arith.constant 0 : index
    %87 = tpu.strided_load %arg7[%c3_40, %c0_41] {strides = array<i32: 4, 1>} : memref<18x18xf32, #tpu.memory_space<vmem>>, vector<4x18xf32>
    %c4_42 = arith.constant 4 : index
    %c0_43 = arith.constant 0 : index
    %88 = tpu.strided_load %arg7[%c4_42, %c0_43] {strides = array<i32: 4, 1>} : memref<18x18xf32, #tpu.memory_space<vmem>>, vector<4x18xf32>
    %89 = arith.addf %85, %86 : vector<4x18xf32>
    %cst_44 = arith.constant 5.000000e-01 : f32
    %90 = vector.broadcast %cst_44 : f32 to vector<4x18xf32>
    %91 = arith.mulf %90, %89 : vector<4x18xf32>
    %c9 = arith.constant 9 : index
    %92 = memref.load %arg1[%c9] : memref<36xf32, #tpu.memory_space<smem>>
    %93 = vector.extract_strided_slice %91 {offsets = [0, 0], sizes = [4, 16], strides = [1, 1]} : vector<4x18xf32> to vector<4x16xf32>
    %94 = vector.broadcast %92 : f32 to vector<4x16xf32>
    %95 = arith.mulf %94, %93 : vector<4x16xf32>
    %c10 = arith.constant 10 : index
    %96 = memref.load %arg1[%c10] : memref<36xf32, #tpu.memory_space<smem>>
    %97 = vector.extract_strided_slice %91 {offsets = [0, 1], sizes = [4, 16], strides = [1, 1]} : vector<4x18xf32> to vector<4x16xf32>
    %98 = vector.broadcast %96 : f32 to vector<4x16xf32>
    %99 = arith.mulf %98, %97 : vector<4x16xf32>
    %100 = arith.addf %95, %99 : vector<4x16xf32>
    %c11 = arith.constant 11 : index
    %101 = memref.load %arg1[%c11] : memref<36xf32, #tpu.memory_space<smem>>
    %102 = vector.extract_strided_slice %91 {offsets = [0, 2], sizes = [4, 16], strides = [1, 1]} : vector<4x18xf32> to vector<4x16xf32>
    %103 = vector.broadcast %101 : f32 to vector<4x16xf32>
    %104 = arith.mulf %103, %102 : vector<4x16xf32>
    %105 = arith.addf %100, %104 : vector<4x16xf32>
    %106 = arith.addf %86, %87 : vector<4x18xf32>
    %cst_45 = arith.constant 5.000000e-01 : f32
    %107 = vector.broadcast %cst_45 : f32 to vector<4x18xf32>
    %108 = arith.mulf %107, %106 : vector<4x18xf32>
    %c12 = arith.constant 12 : index
    %109 = memref.load %arg1[%c12] : memref<36xf32, #tpu.memory_space<smem>>
    %110 = vector.extract_strided_slice %108 {offsets = [0, 0], sizes = [4, 16], strides = [1, 1]} : vector<4x18xf32> to vector<4x16xf32>
    %111 = vector.broadcast %109 : f32 to vector<4x16xf32>
    %112 = arith.mulf %111, %110 : vector<4x16xf32>
    %113 = arith.addf %105, %112 : vector<4x16xf32>
    %c13 = arith.constant 13 : index
    %114 = memref.load %arg1[%c13] : memref<36xf32, #tpu.memory_space<smem>>
    %115 = vector.extract_strided_slice %108 {offsets = [0, 1], sizes = [4, 16], strides = [1, 1]} : vector<4x18xf32> to vector<4x16xf32>
    %116 = vector.broadcast %114 : f32 to vector<4x16xf32>
    %117 = arith.mulf %116, %115 : vector<4x16xf32>
    %118 = arith.addf %113, %117 : vector<4x16xf32>
    %c14 = arith.constant 14 : index
    %119 = memref.load %arg1[%c14] : memref<36xf32, #tpu.memory_space<smem>>
    %120 = vector.extract_strided_slice %108 {offsets = [0, 2], sizes = [4, 16], strides = [1, 1]} : vector<4x18xf32> to vector<4x16xf32>
    %121 = vector.broadcast %119 : f32 to vector<4x16xf32>
    %122 = arith.mulf %121, %120 : vector<4x16xf32>
    %123 = arith.addf %118, %122 : vector<4x16xf32>
    %124 = arith.addf %87, %88 : vector<4x18xf32>
    %cst_46 = arith.constant 5.000000e-01 : f32
    %125 = vector.broadcast %cst_46 : f32 to vector<4x18xf32>
    %126 = arith.mulf %125, %124 : vector<4x18xf32>
    %c15 = arith.constant 15 : index
    %127 = memref.load %arg1[%c15] : memref<36xf32, #tpu.memory_space<smem>>
    %128 = vector.extract_strided_slice %126 {offsets = [0, 0], sizes = [4, 16], strides = [1, 1]} : vector<4x18xf32> to vector<4x16xf32>
    %129 = vector.broadcast %127 : f32 to vector<4x16xf32>
    %130 = arith.mulf %129, %128 : vector<4x16xf32>
    %131 = arith.addf %123, %130 : vector<4x16xf32>
    %c16 = arith.constant 16 : index
    %132 = memref.load %arg1[%c16] : memref<36xf32, #tpu.memory_space<smem>>
    %133 = vector.extract_strided_slice %126 {offsets = [0, 1], sizes = [4, 16], strides = [1, 1]} : vector<4x18xf32> to vector<4x16xf32>
    %134 = vector.broadcast %132 : f32 to vector<4x16xf32>
    %135 = arith.mulf %134, %133 : vector<4x16xf32>
    %136 = arith.addf %131, %135 : vector<4x16xf32>
    %c17 = arith.constant 17 : index
    %137 = memref.load %arg1[%c17] : memref<36xf32, #tpu.memory_space<smem>>
    %138 = vector.extract_strided_slice %126 {offsets = [0, 2], sizes = [4, 16], strides = [1, 1]} : vector<4x18xf32> to vector<4x16xf32>
    %139 = vector.broadcast %137 : f32 to vector<4x16xf32>
    %140 = arith.mulf %139, %138 : vector<4x16xf32>
    %141 = arith.addf %136, %140 : vector<4x16xf32>
    %142 = arith.truncf %141 : vector<4x16xf32> to vector<4x16xbf16>
    %143 = arith.extf %142 : vector<4x16xbf16> to vector<4x16xf32>
    %144 = arith.subf %141, %143 : vector<4x16xf32>
    %145 = arith.truncf %144 : vector<4x16xf32> to vector<4x16xbf16>
    %cst_47 = arith.constant dense<0.000000e+00> : vector<4x4xf32>
    %146 = tpu.matmul %142, %2, %cst_47 {dimension_numbers = #tpu.dot_dimension_numbers<[1], [0], [0], [1], [0, 0, 1, 1], [], []>} : vector<4x16xbf16>, vector<16x4xbf16>, vector<4x4xf32> -> vector<4x4xf32>
    %cst_48 = arith.constant dense<0.000000e+00> : vector<4x4xf32>
    %147 = tpu.matmul %145, %2, %cst_48 {dimension_numbers = #tpu.dot_dimension_numbers<[1], [0], [0], [1], [0, 0, 1, 1], [], []>} : vector<4x16xbf16>, vector<16x4xbf16>, vector<4x4xf32> -> vector<4x4xf32>
    %148 = arith.addf %146, %147 : vector<4x4xf32>
    %c0_49 = arith.constant 0 : index
    %c1_50 = arith.constant 1 : index
    %c0_51 = arith.constant 0 : index
    %c0_52 = arith.constant 0 : index
    %149 = vector.load %arg5[%c0_49, %c1_50, %c0_51, %c0_52] : memref<1x4x4x4xf32, #tpu.memory_space<vmem>>, vector<1x1x4x4xf32>
    %150 = vector.shape_cast %149 : vector<1x1x4x4xf32> to vector<4x4xf32>
    %151 = vector.shape_cast %148 : vector<4x4xf32> to vector<1x1x4x4xf32>
    tpu.vector_store %arg5[%c0_49, %c1_50, %c0_51, %c0_52], %151 {strides = array<i32>} : memref<1x4x4x4xf32, #tpu.memory_space<vmem>>, vector<1x1x4x4xf32>,
    %c0_53 = arith.constant 0 : index
    %c2_54 = arith.constant 2 : index
    %c0_55 = arith.constant 0 : index
    %c0_56 = arith.constant 0 : index
    %152 = vector.load %arg3[%c0_53, %c2_54, %c0_55, %c0_56] : memref<1x4x16x16xf32, #tpu.memory_space<vmem>>, vector<1x1x16x16xf32>
    %153 = vector.shape_cast %152 : vector<1x1x16x16xf32> to vector<16x16xf32>
    %c1_57 = arith.constant 1 : index
    %c1_58 = arith.constant 1 : index
    %154 = vector.load %arg7[%c1_57, %c1_58] : memref<18x18xf32, #tpu.memory_space<vmem>>, vector<16x16xf32>
    tpu.vector_store %arg7[%c1_57, %c1_58], %153 {strides = array<i32>} : memref<18x18xf32, #tpu.memory_space<vmem>>, vector<16x16xf32>,
    %c2_59 = arith.constant 2 : index
    %155 = memref.load %arg2[%c2_59] : memref<4xf32, #tpu.memory_space<smem>>
    %156 = vector.broadcast %155 : f32 to vector<16x16xf32>
    %157 = arith.mulf %156, %153 : vector<16x16xf32>
    %158 = arith.addf %84, %157 : vector<16x16xf32>
    %c1_60 = arith.constant 1 : index
    %c0_61 = arith.constant 0 : index
    %159 = tpu.strided_load %arg7[%c1_60, %c0_61] {strides = array<i32: 4, 1>} : memref<18x18xf32, #tpu.memory_space<vmem>>, vector<4x18xf32>
    %c2_62 = arith.constant 2 : index
    %c0_63 = arith.constant 0 : index
    %160 = tpu.strided_load %arg7[%c2_62, %c0_63] {strides = array<i32: 4, 1>} : memref<18x18xf32, #tpu.memory_space<vmem>>, vector<4x18xf32>
    %c3_64 = arith.constant 3 : index
    %c0_65 = arith.constant 0 : index
    %161 = tpu.strided_load %arg7[%c3_64, %c0_65] {strides = array<i32: 4, 1>} : memref<18x18xf32, #tpu.memory_space<vmem>>, vector<4x18xf32>
    %c4_66 = arith.constant 4 : index
    %c0_67 = arith.constant 0 : index
    %162 = tpu.strided_load %arg7[%c4_66, %c0_67] {strides = array<i32: 4, 1>} : memref<18x18xf32, #tpu.memory_space<vmem>>, vector<4x18xf32>
    %163 = arith.addf %159, %160 : vector<4x18xf32>
    %cst_68 = arith.constant 5.000000e-01 : f32
    %164 = vector.broadcast %cst_68 : f32 to vector<4x18xf32>
    %165 = arith.mulf %164, %163 : vector<4x18xf32>
    %c18 = arith.constant 18 : index
    %166 = memref.load %arg1[%c18] : memref<36xf32, #tpu.memory_space<smem>>
    %167 = vector.extract_strided_slice %165 {offsets = [0, 0], sizes = [4, 16], strides = [1, 1]} : vector<4x18xf32> to vector<4x16xf32>
    %168 = vector.broadcast %166 : f32 to vector<4x16xf32>
    %169 = arith.mulf %168, %167 : vector<4x16xf32>
    %c19 = arith.constant 19 : index
    %170 = memref.load %arg1[%c19] : memref<36xf32, #tpu.memory_space<smem>>
    %171 = vector.extract_strided_slice %165 {offsets = [0, 1], sizes = [4, 16], strides = [1, 1]} : vector<4x18xf32> to vector<4x16xf32>
    %172 = vector.broadcast %170 : f32 to vector<4x16xf32>
    %173 = arith.mulf %172, %171 : vector<4x16xf32>
    %174 = arith.addf %169, %173 : vector<4x16xf32>
    %c20 = arith.constant 20 : index
    %175 = memref.load %arg1[%c20] : memref<36xf32, #tpu.memory_space<smem>>
    %176 = vector.extract_strided_slice %165 {offsets = [0, 2], sizes = [4, 16], strides = [1, 1]} : vector<4x18xf32> to vector<4x16xf32>
    %177 = vector.broadcast %175 : f32 to vector<4x16xf32>
    %178 = arith.mulf %177, %176 : vector<4x16xf32>
    %179 = arith.addf %174, %178 : vector<4x16xf32>
    %180 = arith.addf %160, %161 : vector<4x18xf32>
    %cst_69 = arith.constant 5.000000e-01 : f32
    %181 = vector.broadcast %cst_69 : f32 to vector<4x18xf32>
    %182 = arith.mulf %181, %180 : vector<4x18xf32>
    %c21 = arith.constant 21 : index
    %183 = memref.load %arg1[%c21] : memref<36xf32, #tpu.memory_space<smem>>
    %184 = vector.extract_strided_slice %182 {offsets = [0, 0], sizes = [4, 16], strides = [1, 1]} : vector<4x18xf32> to vector<4x16xf32>
    %185 = vector.broadcast %183 : f32 to vector<4x16xf32>
    %186 = arith.mulf %185, %184 : vector<4x16xf32>
    %187 = arith.addf %179, %186 : vector<4x16xf32>
    %c22 = arith.constant 22 : index
    %188 = memref.load %arg1[%c22] : memref<36xf32, #tpu.memory_space<smem>>
    %189 = vector.extract_strided_slice %182 {offsets = [0, 1], sizes = [4, 16], strides = [1, 1]} : vector<4x18xf32> to vector<4x16xf32>
    %190 = vector.broadcast %188 : f32 to vector<4x16xf32>
    %191 = arith.mulf %190, %189 : vector<4x16xf32>
    %192 = arith.addf %187, %191 : vector<4x16xf32>
    %c23 = arith.constant 23 : index
    %193 = memref.load %arg1[%c23] : memref<36xf32, #tpu.memory_space<smem>>
    %194 = vector.extract_strided_slice %182 {offsets = [0, 2], sizes = [4, 16], strides = [1, 1]} : vector<4x18xf32> to vector<4x16xf32>
    %195 = vector.broadcast %193 : f32 to vector<4x16xf32>
    %196 = arith.mulf %195, %194 : vector<4x16xf32>
    %197 = arith.addf %192, %196 : vector<4x16xf32>
    %198 = arith.addf %161, %162 : vector<4x18xf32>
    %cst_70 = arith.constant 5.000000e-01 : f32
    %199 = vector.broadcast %cst_70 : f32 to vector<4x18xf32>
    %200 = arith.mulf %199, %198 : vector<4x18xf32>
    %c24 = arith.constant 24 : index
    %201 = memref.load %arg1[%c24] : memref<36xf32, #tpu.memory_space<smem>>
    %202 = vector.extract_strided_slice %200 {offsets = [0, 0], sizes = [4, 16], strides = [1, 1]} : vector<4x18xf32> to vector<4x16xf32>
    %203 = vector.broadcast %201 : f32 to vector<4x16xf32>
    %204 = arith.mulf %203, %202 : vector<4x16xf32>
    %205 = arith.addf %197, %204 : vector<4x16xf32>
    %c25 = arith.constant 25 : index
    %206 = memref.load %arg1[%c25] : memref<36xf32, #tpu.memory_space<smem>>
    %207 = vector.extract_strided_slice %200 {offsets = [0, 1], sizes = [4, 16], strides = [1, 1]} : vector<4x18xf32> to vector<4x16xf32>
    %208 = vector.broadcast %206 : f32 to vector<4x16xf32>
    %209 = arith.mulf %208, %207 : vector<4x16xf32>
    %210 = arith.addf %205, %209 : vector<4x16xf32>
    %c26 = arith.constant 26 : index
    %211 = memref.load %arg1[%c26] : memref<36xf32, #tpu.memory_space<smem>>
    %212 = vector.extract_strided_slice %200 {offsets = [0, 2], sizes = [4, 16], strides = [1, 1]} : vector<4x18xf32> to vector<4x16xf32>
    %213 = vector.broadcast %211 : f32 to vector<4x16xf32>
    %214 = arith.mulf %213, %212 : vector<4x16xf32>
    %215 = arith.addf %210, %214 : vector<4x16xf32>
    %216 = arith.truncf %215 : vector<4x16xf32> to vector<4x16xbf16>
    %217 = arith.extf %216 : vector<4x16xbf16> to vector<4x16xf32>
    %218 = arith.subf %215, %217 : vector<4x16xf32>
    %219 = arith.truncf %218 : vector<4x16xf32> to vector<4x16xbf16>
    %cst_71 = arith.constant dense<0.000000e+00> : vector<4x4xf32>
    %220 = tpu.matmul %216, %2, %cst_71 {dimension_numbers = #tpu.dot_dimension_numbers<[1], [0], [0], [1], [0, 0, 1, 1], [], []>} : vector<4x16xbf16>, vector<16x4xbf16>, vector<4x4xf32> -> vector<4x4xf32>
    %cst_72 = arith.constant dense<0.000000e+00> : vector<4x4xf32>
    %221 = tpu.matmul %219, %2, %cst_72 {dimension_numbers = #tpu.dot_dimension_numbers<[1], [0], [0], [1], [0, 0, 1, 1], [], []>} : vector<4x16xbf16>, vector<16x4xbf16>, vector<4x4xf32> -> vector<4x4xf32>
    %222 = arith.addf %220, %221 : vector<4x4xf32>
    %c0_73 = arith.constant 0 : index
    %c2_74 = arith.constant 2 : index
    %c0_75 = arith.constant 0 : index
    %c0_76 = arith.constant 0 : index
    %223 = vector.load %arg5[%c0_73, %c2_74, %c0_75, %c0_76] : memref<1x4x4x4xf32, #tpu.memory_space<vmem>>, vector<1x1x4x4xf32>
    %224 = vector.shape_cast %223 : vector<1x1x4x4xf32> to vector<4x4xf32>
    %225 = vector.shape_cast %222 : vector<4x4xf32> to vector<1x1x4x4xf32>
    tpu.vector_store %arg5[%c0_73, %c2_74, %c0_75, %c0_76], %225 {strides = array<i32>} : memref<1x4x4x4xf32, #tpu.memory_space<vmem>>, vector<1x1x4x4xf32>,
    %c0_77 = arith.constant 0 : index
    %c3_78 = arith.constant 3 : index
    %c0_79 = arith.constant 0 : index
    %c0_80 = arith.constant 0 : index
    %226 = vector.load %arg3[%c0_77, %c3_78, %c0_79, %c0_80] : memref<1x4x16x16xf32, #tpu.memory_space<vmem>>, vector<1x1x16x16xf32>
    %227 = vector.shape_cast %226 : vector<1x1x16x16xf32> to vector<16x16xf32>
    %c1_81 = arith.constant 1 : index
    %c1_82 = arith.constant 1 : index
    %228 = vector.load %arg7[%c1_81, %c1_82] : memref<18x18xf32, #tpu.memory_space<vmem>>, vector<16x16xf32>
    tpu.vector_store %arg7[%c1_81, %c1_82], %227 {strides = array<i32>} : memref<18x18xf32, #tpu.memory_space<vmem>>, vector<16x16xf32>,
    %c3_83 = arith.constant 3 : index
    %229 = memref.load %arg2[%c3_83] : memref<4xf32, #tpu.memory_space<smem>>
    %230 = vector.broadcast %229 : f32 to vector<16x16xf32>
    %231 = arith.mulf %230, %227 : vector<16x16xf32>
    %232 = arith.addf %158, %231 : vector<16x16xf32>
    %c1_84 = arith.constant 1 : index
    %c0_85 = arith.constant 0 : index
    %233 = tpu.strided_load %arg7[%c1_84, %c0_85] {strides = array<i32: 4, 1>} : memref<18x18xf32, #tpu.memory_space<vmem>>, vector<4x18xf32>
    %c2_86 = arith.constant 2 : index
    %c0_87 = arith.constant 0 : index
    %234 = tpu.strided_load %arg7[%c2_86, %c0_87] {strides = array<i32: 4, 1>} : memref<18x18xf32, #tpu.memory_space<vmem>>, vector<4x18xf32>
    %c3_88 = arith.constant 3 : index
    %c0_89 = arith.constant 0 : index
    %235 = tpu.strided_load %arg7[%c3_88, %c0_89] {strides = array<i32: 4, 1>} : memref<18x18xf32, #tpu.memory_space<vmem>>, vector<4x18xf32>
    %c4_90 = arith.constant 4 : index
    %c0_91 = arith.constant 0 : index
    %236 = tpu.strided_load %arg7[%c4_90, %c0_91] {strides = array<i32: 4, 1>} : memref<18x18xf32, #tpu.memory_space<vmem>>, vector<4x18xf32>
    %237 = arith.addf %233, %234 : vector<4x18xf32>
    %cst_92 = arith.constant 5.000000e-01 : f32
    %238 = vector.broadcast %cst_92 : f32 to vector<4x18xf32>
    %239 = arith.mulf %238, %237 : vector<4x18xf32>
    %c27 = arith.constant 27 : index
    %240 = memref.load %arg1[%c27] : memref<36xf32, #tpu.memory_space<smem>>
    %241 = vector.extract_strided_slice %239 {offsets = [0, 0], sizes = [4, 16], strides = [1, 1]} : vector<4x18xf32> to vector<4x16xf32>
    %242 = vector.broadcast %240 : f32 to vector<4x16xf32>
    %243 = arith.mulf %242, %241 : vector<4x16xf32>
    %c28 = arith.constant 28 : index
    %244 = memref.load %arg1[%c28] : memref<36xf32, #tpu.memory_space<smem>>
    %245 = vector.extract_strided_slice %239 {offsets = [0, 1], sizes = [4, 16], strides = [1, 1]} : vector<4x18xf32> to vector<4x16xf32>
    %246 = vector.broadcast %244 : f32 to vector<4x16xf32>
    %247 = arith.mulf %246, %245 : vector<4x16xf32>
    %248 = arith.addf %243, %247 : vector<4x16xf32>
    %c29 = arith.constant 29 : index
    %249 = memref.load %arg1[%c29] : memref<36xf32, #tpu.memory_space<smem>>
    %250 = vector.extract_strided_slice %239 {offsets = [0, 2], sizes = [4, 16], strides = [1, 1]} : vector<4x18xf32> to vector<4x16xf32>
    %251 = vector.broadcast %249 : f32 to vector<4x16xf32>
    %252 = arith.mulf %251, %250 : vector<4x16xf32>
    %253 = arith.addf %248, %252 : vector<4x16xf32>
    %254 = arith.addf %234, %235 : vector<4x18xf32>
    %cst_93 = arith.constant 5.000000e-01 : f32
    %255 = vector.broadcast %cst_93 : f32 to vector<4x18xf32>
    %256 = arith.mulf %255, %254 : vector<4x18xf32>
    %c30 = arith.constant 30 : index
    %257 = memref.load %arg1[%c30] : memref<36xf32, #tpu.memory_space<smem>>
    %258 = vector.extract_strided_slice %256 {offsets = [0, 0], sizes = [4, 16], strides = [1, 1]} : vector<4x18xf32> to vector<4x16xf32>
    %259 = vector.broadcast %257 : f32 to vector<4x16xf32>
    %260 = arith.mulf %259, %258 : vector<4x16xf32>
    %261 = arith.addf %253, %260 : vector<4x16xf32>
    %c31 = arith.constant 31 : index
    %262 = memref.load %arg1[%c31] : memref<36xf32, #tpu.memory_space<smem>>
    %263 = vector.extract_strided_slice %256 {offsets = [0, 1], sizes = [4, 16], strides = [1, 1]} : vector<4x18xf32> to vector<4x16xf32>
    %264 = vector.broadcast %262 : f32 to vector<4x16xf32>
    %265 = arith.mulf %264, %263 : vector<4x16xf32>
    %266 = arith.addf %261, %265 : vector<4x16xf32>
    %c32 = arith.constant 32 : index
    %267 = memref.load %arg1[%c32] : memref<36xf32, #tpu.memory_space<smem>>
    %268 = vector.extract_strided_slice %256 {offsets = [0, 2], sizes = [4, 16], strides = [1, 1]} : vector<4x18xf32> to vector<4x16xf32>
    %269 = vector.broadcast %267 : f32 to vector<4x16xf32>
    %270 = arith.mulf %269, %268 : vector<4x16xf32>
    %271 = arith.addf %266, %270 : vector<4x16xf32>
    %272 = arith.addf %235, %236 : vector<4x18xf32>
    %cst_94 = arith.constant 5.000000e-01 : f32
    %273 = vector.broadcast %cst_94 : f32 to vector<4x18xf32>
    %274 = arith.mulf %273, %272 : vector<4x18xf32>
    %c33 = arith.constant 33 : index
    %275 = memref.load %arg1[%c33] : memref<36xf32, #tpu.memory_space<smem>>
    %276 = vector.extract_strided_slice %274 {offsets = [0, 0], sizes = [4, 16], strides = [1, 1]} : vector<4x18xf32> to vector<4x16xf32>
    %277 = vector.broadcast %275 : f32 to vector<4x16xf32>
    %278 = arith.mulf %277, %276 : vector<4x16xf32>
    %279 = arith.addf %271, %278 : vector<4x16xf32>
    %c34 = arith.constant 34 : index
    %280 = memref.load %arg1[%c34] : memref<36xf32, #tpu.memory_space<smem>>
    %281 = vector.extract_strided_slice %274 {offsets = [0, 1], sizes = [4, 16], strides = [1, 1]} : vector<4x18xf32> to vector<4x16xf32>
    %282 = vector.broadcast %280 : f32 to vector<4x16xf32>
    %283 = arith.mulf %282, %281 : vector<4x16xf32>
    %284 = arith.addf %279, %283 : vector<4x16xf32>
    %c35 = arith.constant 35 : index
    %285 = memref.load %arg1[%c35] : memref<36xf32, #tpu.memory_space<smem>>
    %286 = vector.extract_strided_slice %274 {offsets = [0, 2], sizes = [4, 16], strides = [1, 1]} : vector<4x18xf32> to vector<4x16xf32>
    %287 = vector.broadcast %285 : f32 to vector<4x16xf32>
    %288 = arith.mulf %287, %286 : vector<4x16xf32>
    %289 = arith.addf %284, %288 : vector<4x16xf32>
    %290 = arith.truncf %289 : vector<4x16xf32> to vector<4x16xbf16>
    %291 = arith.extf %290 : vector<4x16xbf16> to vector<4x16xf32>
    %292 = arith.subf %289, %291 : vector<4x16xf32>
    %293 = arith.truncf %292 : vector<4x16xf32> to vector<4x16xbf16>
    %cst_95 = arith.constant dense<0.000000e+00> : vector<4x4xf32>
    %294 = tpu.matmul %290, %2, %cst_95 {dimension_numbers = #tpu.dot_dimension_numbers<[1], [0], [0], [1], [0, 0, 1, 1], [], []>} : vector<4x16xbf16>, vector<16x4xbf16>, vector<4x4xf32> -> vector<4x4xf32>
    %cst_96 = arith.constant dense<0.000000e+00> : vector<4x4xf32>
    %295 = tpu.matmul %293, %2, %cst_96 {dimension_numbers = #tpu.dot_dimension_numbers<[1], [0], [0], [1], [0, 0, 1, 1], [], []>} : vector<4x16xbf16>, vector<16x4xbf16>, vector<4x4xf32> -> vector<4x4xf32>
    %296 = arith.addf %294, %295 : vector<4x4xf32>
    %c0_97 = arith.constant 0 : index
    %c3_98 = arith.constant 3 : index
    %c0_99 = arith.constant 0 : index
    %c0_100 = arith.constant 0 : index
    %297 = vector.load %arg5[%c0_97, %c3_98, %c0_99, %c0_100] : memref<1x4x4x4xf32, #tpu.memory_space<vmem>>, vector<1x1x4x4xf32>
    %298 = vector.shape_cast %297 : vector<1x1x4x4xf32> to vector<4x4xf32>
    %299 = vector.shape_cast %296 : vector<4x4xf32> to vector<1x1x4x4xf32>
    tpu.vector_store %arg5[%c0_97, %c3_98, %c0_99, %c0_100], %299 {strides = array<i32>} : memref<1x4x4x4xf32, #tpu.memory_space<vmem>>, vector<1x1x4x4xf32>,
    %c0_101 = arith.constant 0 : index
    %c0_102 = arith.constant 0 : index
    %c0_103 = arith.constant 0 : index
    %c0_104 = arith.constant 0 : index
    %300 = vector.load %arg6[%c0_101, %c0_102, %c0_103, %c0_104] : memref<1x1x16x16xf32, #tpu.memory_space<vmem>>, vector<1x1x16x16xf32>
    %301 = vector.shape_cast %300 : vector<1x1x16x16xf32> to vector<16x16xf32>
    %302 = vector.shape_cast %232 : vector<16x16xf32> to vector<1x1x16x16xf32>
    tpu.vector_store %arg6[%c0_101, %c0_102, %c0_103, %c0_104], %302 {strides = array<i32>} : memref<1x1x16x16xf32, #tpu.memory_space<vmem>>, vector<1x1x16x16xf32>,
    return
  }
  func.func @transform_0(%arg0: i32) -> i32 {
    %c0_i32 = arith.constant 0 : i32
    %c0_i32_0 = arith.constant 0 : i32
    return %c0_i32 : i32
  }
  func.func @transform_1(%arg0: i32) -> i32 {
    %c0_i32 = arith.constant 0 : i32
    %c0_i32_0 = arith.constant 0 : i32
    return %c0_i32 : i32
  }
  func.func @transform_2(%arg0: i32) -> (i32, i32, i32, i32) {
    %c0_i32 = arith.constant 0 : i32
    %c0_i32_0 = arith.constant 0 : i32
    %c0_i32_1 = arith.constant 0 : i32
    %c0_i32_2 = arith.constant 0 : i32
    return %arg0, %c0_i32, %c0_i32_0, %c0_i32_1 : i32, i32, i32, i32
  }
  func.func @transform_3(%arg0: i32) -> (i32, i32) {
    %c0_i32 = arith.constant 0 : i32
    %c0_i32_0 = arith.constant 0 : i32
    %c0_i32_1 = arith.constant 0 : i32
    return %c0_i32, %c0_i32_0 : i32, i32
  }
  func.func @transform_4(%arg0: i32) -> (i32, i32, i32, i32) {
    %c0_i32 = arith.constant 0 : i32
    %c0_i32_0 = arith.constant 0 : i32
    %c0_i32_1 = arith.constant 0 : i32
    %c0_i32_2 = arith.constant 0 : i32
    return %arg0, %c0_i32, %c0_i32_0, %c0_i32_1 : i32, i32, i32, i32
  }
  func.func @transform_5(%arg0: i32) -> (i32, i32, i32, i32) {
    %c0_i32 = arith.constant 0 : i32
    %c0_i32_0 = arith.constant 0 : i32
    %c0_i32_1 = arith.constant 0 : i32
    %c0_i32_2 = arith.constant 0 : i32
    return %arg0, %c0_i32, %c0_i32_0, %c0_i32_1 : i32, i32, i32, i32
  }
}

</mosaic_0001>

<llo_original>
// kernel: rec_convnet_forward.1
$region0: #{rec_convnet_forward.1}
  #allocation0 [shape = 'u32[]', space=smem, size = 0x4, offset = 0x4, fixed_abs, tag = 'smem constant byte address 0x4 - core index']
  #allocation1 [shape = 'u32[144,128]{1,0:T(1,128)}', space=vmem, size = 0x12000, scoped, tag = 'internal scratch']
  #allocation2 [shape = 'f32[18,18]{1,0:T(8,128)}', space=vmem, size = 0x3000, scoped, tag = 'scratch operand']
  %s0 = inlined_call_operand.vmem [shape: f32[36], index: 0, kind: input, shape index: {}]
  %s1 = inlined_call_operand.vmem [shape: f32[4], index: 1, kind: input, shape index: {}]
  %s2 = inlined_call_operand.hbm [shape: f32[2,4,16,16], index: 2, kind: input, shape index: {}]
  %s3 = inlined_call_operand.vmem [shape: bf16[16,4], index: 3, kind: input, shape index: {}]
  %s4 = inlined_call_operand.hbm [shape: f32[2,4,4,4], index: 4, kind: output, shape index: {0}]
  %s5 = inlined_call_operand.hbm [shape: f32[2,1,16,16], index: 5, kind: output, shape index: {1}]
  %6 = xla_tuple %s4, %s5
  %s7 = sld [smem:[#allocation0]]
  $region69: #{rec_convnet_forward.1} parent=0
    _
  %s9 = ssub.s32 1, %s7
  %s10 = scalar_select 0, %s9, %s7
  $region1: #{rec_convnet_forward.1} parent=0
    #allocation3 [shape = 'u8[512]{0}', space=smem, size = 0x200, scoped, tag = 'input window, operand 0, single buffered']
    #allocation4 [shape = 's32[2]{0}', space=sflag, size = 0x8, scoped, tag = 'scoped memory for rec_convnet_forward.1']
    #allocation5 [shape = 's32[2]{0}', space=sflag, size = 0x8, scoped, tag = 'scoped memory for rec_convnet_forward.1']
    #allocation6 [shape = 's32[2]{0}', space=sflag, size = 0x8, scoped, tag = 'scoped memory for rec_convnet_forward.1']
    #allocation7 [shape = 'u8[512]{0}', space=smem, size = 0x200, scoped, tag = 'input window, operand 1, single buffered']
    #allocation8 [shape = 's32[1]{0}', space=sflag, size = 0x4, scoped, tag = 'scoped memory for rec_convnet_forward.1']
    #allocation9 [shape = 'u8[65536]{0}', space=vmem, size = 0x10000, scoped, tag = 'input window, operand 2']
    #allocation10 [shape = 'u8[16384]{0}', space=vmem, size = 0x4000, scoped, tag = 'output window, operand 0']
    #allocation11 [shape = 'u8[16384]{0}', space=vmem, size = 0x4000, scoped, tag = 'output window, operand 1']
    #allocation12 [shape = 's32[2]{0}', space=sflag, size = 0x8, scoped, tag = 'scoped memory for rec_convnet_forward.1']
    %11 = vsyncpa [#allocation6], 0
    %12 = vsyncpa [#allocation8], 0
    %13 = vsyncpa [#allocation4], 0
    %s14 = scalar_lea.sflag [#allocation4], 1
    %15 = vsyncpa %s14, 0
    %16 = vsyncpa [#allocation5], 0
    %s17 = scalar_lea.sflag [#allocation5], 1
    %18 = vsyncpa %s17, 0
    %19 = vsyncpa [#allocation12], 0
    %s20 = scalar_lea.sflag [#allocation12], 1
    %21 = vsyncpa %s20, 0
    loop: start=0, step=1, limit=4
    $region2: #{rec_convnet_forward.1} parent=1 // loop_pre_header
      _
    $region3: #{rec_convnet_forward.1} parent=1 // loop_header
      %s23 = sphi 0, %s27
      %p24 = scmp.ge.s32.totalorder %s23, 4
      %s31 = sphi 0, %s31
      %s33 = sphi 0, %s31
      %s34 = sphi 0, %s33
      %s48 = sphi 0, %s34
      %s52 = sphi 0, %s52
      %s54 = sphi 0, %s52
      %s55 = sphi 0, %s54
      %s69 = sphi 0, %s55
      %s75 = sphi 0, %s77
      %s78 = sphi 0, %s75
      %s79 = sphi 0, %s78
      %s95 = sphi 0, %s79
      %s99 = sphi 0, %s99
      %s101 = sphi 0, %s99
      %s102 = sphi 0, %s101
      %s116 = sphi 0, %s102
      %s122 = sphi 0, %s124
      %s125 = sphi 0, %s122
      %s126 = sphi 0, %s125
      %s142 = sphi 0, %s126
      %s148 = sphi 0, %s150
      %s151 = sphi 0, %s148
      %s152 = sphi 0, %s151
      %s168 = sphi 0, %s152
    $region4: #{rec_convnet_forward.1} parent=1 // loop_header_branch
      %26 = sbr.rel (%p24) target = $region8
    $region5: #{rec_convnet_forward.1} parent=1 // loop_body
      %s28 = ssub.s32 %s23, 1
      %s29 = ssub.s32 %s23, 2
      %s30 = sadd.s32 %s23, 1
      %s32 = sadd.s32 %s31, 1
      %p35 = scmp.eq.s32.totalorder %s23, 1
      %p36 = scmp.ne.s32.totalorder %s31, %s33
      %p37 = scmp.eq.s32.totalorder %s23, 0
      %p38 = por %p36, %p37
      %p39 = scmp.ne.s32.totalorder %s31, %s33
      %p40 = scmp.eq.s32.totalorder %s28, 1
      %p41 = por %p39, %p40
      %p42 = scmp.ne.s32.totalorder %s33, %s34
      %p43 = scmp.eq.s32.totalorder %s28, 0
      %p44 = por %p42, %p43
      %p45 = scmp.ne.s32.totalorder %s33, %s34
      %p46 = scmp.eq.s32.totalorder %s29, 1
      %p47 = por %p45, %p46
      %p49 = scmp.ne.s32.totalorder %s34, %s48
      %p50 = scmp.eq.s32.totalorder %s29, 0
      %p51 = por %p49, %p50
      %s53 = sadd.s32 %s52, 1
      %p56 = scmp.eq.s32.totalorder %s23, 1
      %p57 = scmp.ne.s32.totalorder %s52, %s54
      %p58 = scmp.eq.s32.totalorder %s23, 0
      %p59 = por %p57, %p58
      %p60 = scmp.ne.s32.totalorder %s52, %s54
      %p61 = scmp.eq.s32.totalorder %s28, 1
      %p62 = por %p60, %p61
      %p63 = scmp.ne.s32.totalorder %s54, %s55
      %p64 = scmp.eq.s32.totalorder %s28, 0
      %p65 = por %p63, %p64
      %p66 = scmp.ne.s32.totalorder %s54, %s55
      %p67 = scmp.eq.s32.totalorder %s29, 1
      %p68 = por %p66, %p67
      %p70 = scmp.ne.s32.totalorder %s55, %s69
      %p71 = scmp.eq.s32.totalorder %s29, 0
      %p72 = por %p70, %p71
      %s73 = ssub.s32 %s23, %s30
      %p74 = scmp.eq.s32.totalorder %s73, 0
      %s76 = sadd.s32 %s75, 1
      %s77 = scalar_select %p74, %s75, %s76
      %p80 = pneg %p74
      %p81 = scmp.eq.s32.totalorder %s23, 1
      %p82 = por %p80, %p81
      %p83 = scmp.ne.s32.totalorder %s75, %s78
      %p84 = scmp.eq.s32.totalorder %s23, 0
      %p85 = por %p83, %p84
      %p86 = scmp.ne.s32.totalorder %s75, %s78
      %p87 = scmp.eq.s32.totalorder %s28, 1
      %p88 = por %p86, %p87
      %p89 = scmp.ne.s32.totalorder %s78, %s79
      %p90 = scmp.eq.s32.totalorder %s28, 0
      %p91 = por %p89, %p90
      %p92 = scmp.ne.s32.totalorder %s78, %s79
      %p93 = scmp.eq.s32.totalorder %s29, 1
      %p94 = por %p92, %p93
      %p96 = scmp.ne.s32.totalorder %s79, %s95
      %p97 = scmp.eq.s32.totalorder %s29, 0
      %p98 = por %p96, %p97
      %s100 = sadd.s32 %s99, 1
      %p103 = scmp.eq.s32.totalorder %s23, 1
      %p104 = scmp.ne.s32.totalorder %s99, %s101
      %p105 = scmp.eq.s32.totalorder %s23, 0
      %p106 = por %p104, %p105
      %p107 = scmp.ne.s32.totalorder %s99, %s101
      %p108 = scmp.eq.s32.totalorder %s28, 1
      %p109 = por %p107, %p108
      %p110 = scmp.ne.s32.totalorder %s101, %s102
      %p111 = scmp.eq.s32.totalorder %s28, 0
      %p112 = por %p110, %p111
      %p113 = scmp.ne.s32.totalorder %s101, %s102
      %p114 = scmp.eq.s32.totalorder %s29, 1
      %p115 = por %p113, %p114
      %p117 = scmp.ne.s32.totalorder %s102, %s116
      %p118 = scmp.eq.s32.totalorder %s29, 0
      %p119 = por %p117, %p118
      %s120 = ssub.s32 %s23, %s30
      %p121 = scmp.eq.s32.totalorder %s120, 0
      %s123 = sadd.s32 %s122, 1
      %s124 = scalar_select %p121, %s122, %s123
      %p127 = pneg %p121
      %p128 = scmp.eq.s32.totalorder %s23, 1
      %p129 = por %p127, %p128
      %p130 = scmp.ne.s32.totalorder %s122, %s125
      %p131 = scmp.eq.s32.totalorder %s23, 0
      %p132 = por %p130, %p131
      %p133 = scmp.ne.s32.totalorder %s122, %s125
      %p134 = scmp.eq.s32.totalorder %s28, 1
      %p135 = por %p133, %p134
      %p136 = scmp.ne.s32.totalorder %s125, %s126
      %p137 = scmp.eq.s32.totalorder %s28, 0
      %p138 = por %p136, %p137
      %p139 = scmp.ne.s32.totalorder %s125, %s126
      %p140 = scmp.eq.s32.totalorder %s29, 1
      %p141 = por %p139, %p140
      %p143 = scmp.ne.s32.totalorder %s126, %s142
      %p144 = scmp.eq.s32.totalorder %s29, 0
      %p145 = por %p143, %p144
      %s146 = ssub.s32 %s23, %s30
      %p147 = scmp.eq.s32.totalorder %s146, 0
      %s149 = sadd.s32 %s148, 1
      %s150 = scalar_select %p147, %s148, %s149
      %p153 = pneg %p147
      %p154 = scmp.eq.s32.totalorder %s23, 1
      %p155 = por %p153, %p154
      %p156 = scmp.ne.s32.totalorder %s148, %s151
      %p157 = scmp.eq.s32.totalorder %s23, 0
      %p158 = por %p156, %p157
      %p159 = scmp.ne.s32.totalorder %s148, %s151
      %p160 = scmp.eq.s32.totalorder %s28, 1
      %p161 = por %p159, %p160
      %p162 = scmp.ne.s32.totalorder %s151, %s152
      %p163 = scmp.eq.s32.totalorder %s28, 0
      %p164 = por %p162, %p163
      %p165 = scmp.ne.s32.totalorder %s151, %s152
      %p166 = scmp.eq.s32.totalorder %s29, 1
      %p167 = por %p165, %p166
      %p169 = scmp.ne.s32.totalorder %s152, %s168
      %p170 = scmp.eq.s32.totalorder %s29, 0
      %p171 = por %p169, %p170
      %p172 = scmp.le.s32.totalorder 1, %s23
      %p173 = scmp.lt.s32.totalorder %s23, 3
      %p174 = pnand %p172, %p173
      %p175 = pneg %p174
      // Predicated region
      $region9: #{rec_convnet_forward.1} parent=5 // pred_check
        _
      $region10: #{rec_convnet_forward.1} parent=5 // pred_check_branch
        %177 = sbr.rel (%p174) target = $region12
      $region11: #{rec_convnet_forward.1} parent=5 // pred_region
        %s178 = ssub.s32 %s23, 1
        // Predicated region
        $region13: #{rec_convnet_forward.1} parent=11 // pred_check
          %p179 = pneg %p44
        $region14: #{rec_convnet_forward.1} parent=11 // pred_check_branch
          %181 = sbr.rel (%p179) target = $region16
        $region15: #{rec_convnet_forward.1} parent=11 // pred_region
          %s183 = ssub.s32 16, 16
          %184 = vsyncadd [#allocation6], %s183
          %s186 = sshll.u32 %s0, 4
          %s187 = int_to_ptr.vmem [resolvable:$true] %s186
          %189 = dma.vmem_to_smem %s187, 16, [#allocation3], [#allocation6]
        $region16: #{rec_convnet_forward.1} parent=11 // pred_fallthru
          _
        // Predicated region
        $region17: #{rec_convnet_forward.1} parent=11 // pred_check
          %p190 = pneg %p65
        $region18: #{rec_convnet_forward.1} parent=11 // pred_check_branch
          %192 = sbr.rel (%p190) target = $region20
        $region19: #{rec_convnet_forward.1} parent=11 // pred_region
          %s194 = ssub.s32 16, 16
          %195 = vsyncadd [#allocation8], %s194
          %s197 = sshll.u32 %s1, 4
          %s198 = int_to_ptr.vmem [resolvable:$true] %s197
          %200 = dma.vmem_to_smem %s198, 16, [#allocation7], [#allocation8]
        $region20: #{rec_convnet_forward.1} parent=11 // pred_fallthru
          _
        // Predicated region
        $region21: #{rec_convnet_forward.1} parent=11 // pred_check
          %p201 = pneg %p112
        $region22: #{rec_convnet_forward.1} parent=11 // pred_check_branch
          %203 = sbr.rel (%p201) target = $region24
        $region23: #{rec_convnet_forward.1} parent=11 // pred_region
          _
        $region24: #{rec_convnet_forward.1} parent=11 // pred_fallthru
          _
      $region12: #{rec_convnet_forward.1} parent=5 // pred_fallthru
        _
      %p204 = scmp.lt.s32.totalorder %s23, 2
      // Predicated region
      $region25: #{rec_convnet_forward.1} parent=5 // pred_check
        %p205 = pneg %p204
      $region26: #{rec_convnet_forward.1} parent=5 // pred_check_branch
        %207 = sbr.rel (%p205) target = $region28
      $region27: #{rec_convnet_forward.1} parent=5 // pred_region
        // Predicated region
        $region29: #{rec_convnet_forward.1} parent=27 // pred_check
          %p208 = pneg %p85
        $region30: #{rec_convnet_forward.1} parent=27 // pred_check_branch
          %210 = sbr.rel (%p208) target = $region32
        $region31: #{rec_convnet_forward.1} parent=27 // pred_region
          %s211 = sand.u32 %s75, 1
          %s212 = scalar_lea.sflag [#allocation4], %s211
          %s213 = sand.u32 %s75, 1
          %s214 = smul.addr %s213, 64
          %s215 = scalar_lea.vmem [#allocation9], %s214
          %s217 = ssub.s32 1024, 1024
          %218 = vsyncadd %s212, %s217
          %s219 = smul.addr %s23, 8
          %s220 = smul.addr %s219, 128
          %s221 = scalar_lea.hbm %s2, %s220
          %s222 = sshll.u32 %s215, 4
          %s223 = int_to_ptr.vmem [resolvable:$true] %s222
          %228 = dma.hbm_to_vmem [thread:$0]  %s221, 1024, %s223, %s212, 128, 128, 8
        $region32: #{rec_convnet_forward.1} parent=27 // pred_fallthru
          _
      $region28: #{rec_convnet_forward.1} parent=5 // pred_fallthru
        _
      %p229 = scmp.le.s32.totalorder 1, %s23
      %p230 = scmp.lt.s32.totalorder %s23, 3
      %p231 = pnand %p229, %p230
      %p232 = pneg %p231
      // Predicated region
      $region33: #{rec_convnet_forward.1} parent=5 // pred_check
        _
      $region34: #{rec_convnet_forward.1} parent=5 // pred_check_branch
        %234 = sbr.rel (%p231) target = $region36
      $region35: #{rec_convnet_forward.1} parent=5 // pred_region
        %s235 = ssub.s32 %s23, 1
        // Predicated region
        $region37: #{rec_convnet_forward.1} parent=35 // pred_check
          %p236 = pneg %p44
        $region38: #{rec_convnet_forward.1} parent=35 // pred_check_branch
          %238 = sbr.rel (%p236) target = $region40
        $region39: #{rec_convnet_forward.1} parent=35 // pred_region
          %239 = dma.done [#allocation6], 16
        $region40: #{rec_convnet_forward.1} parent=35 // pred_fallthru
          _
        // Predicated region
        $region41: #{rec_convnet_forward.1} parent=35 // pred_check
          %p240 = pneg %p65
        $region42: #{rec_convnet_forward.1} parent=35 // pred_check_branch
          %242 = sbr.rel (%p240) target = $region44
        $region43: #{rec_convnet_forward.1} parent=35 // pred_region
          %243 = dma.done [#allocation8], 16
        $region44: #{rec_convnet_forward.1} parent=35 // pred_fallthru
          _
        %s244 = sand.u32 %s78, 1
        %s245 = scalar_lea.sflag [#allocation4], %s244
        %s246 = sand.u32 %s78, 1
        %s247 = smul.addr %s246, 64
        %s248 = scalar_lea.vmem [#allocation9], %s247
        // Predicated region
        $region45: #{rec_convnet_forward.1} parent=35 // pred_check
          %p249 = pneg %p91
        $region46: #{rec_convnet_forward.1} parent=35 // pred_check_branch
          %251 = sbr.rel (%p249) target = $region48
        $region47: #{rec_convnet_forward.1} parent=35 // pred_region
          %252 = dma.done %s245, 1024
        $region48: #{rec_convnet_forward.1} parent=35 // pred_fallthru
          _
        %253 = sfence
        %p254 = pneg %p44
        %p255 = pneg %p41
        %p256 = pneg %p65
        %p257 = pneg %p62
        %s258 = sand.u32 %s78, 1
        %s259 = scalar_lea.sflag [#allocation4], %s258
        %s260 = sand.u32 %s78, 1
        %s261 = smul.addr %s260, 64
        %s262 = scalar_lea.vmem [#allocation9], %s261
        %p263 = pneg %p91
        %p264 = pneg %p88
        %p265 = pneg %p112
        %p266 = pneg %p109
        %p267 = pneg %p138
        %p268 = pneg %p135
        %s269 = sand.u32 %s125, 1
        %s270 = scalar_lea.sflag [#allocation5], %s269
        %s271 = sand.u32 %s125, 1
        %s272 = smul.addr %s271, 16
        %s273 = scalar_lea.vmem [#allocation10], %s272
        %p274 = pneg %p164
        %p275 = pneg %p161
        %s276 = sand.u32 %s151, 1
        %s277 = scalar_lea.sflag [#allocation12], %s276
        %s278 = sand.u32 %s151, 1
        %s279 = smul.addr %s278, 16
        %s280 = scalar_lea.vmem [#allocation11], %s279
        %vm282 = vcmask 146432
        %283 = vst.msk [vmem:[#allocation2] sm:$0xff] %vm282, 0.0
        %284 = vst.msk [vmem:[#allocation2 + $0x8] sm:$0xff] %vm282, 0.0
        %vm285 = vcmask 140288
        %286 = vst.msk [vmem:[#allocation2 + $0x10] sm:$0x3] %vm285, 0.0
        %v287 = vld [vmem:[%s3] sm:$0xf]
        %v288 = vld [vmem:[%s3 + $0x4] sm:$0xf]
        %v289 = vld [vmem:[%s248] sm:$0xff]
        %v290 = vld [vmem:[%s248 + $0x8] sm:$0xff]
        %293 = vrot.lane.b32.xlu0 %v289, 1
        %v294 = vpop.permute.xlu0 %293
        %295 = vrot.lane.b32.xlu0 %v290, 1
        %v296 = vpop.permute.xlu0 %295
        %vm299 = vcmask 138248
        %300 = vst.msk [vmem:[#allocation2 + $0x1] sm:$0xff] %vm299, %v294
        %301 = vst.msk [vmem:[#allocation2 + $0x9] sm:$0xff] %vm299, %v296
        %s302 = sld [smem:[#allocation7]]
        %v303 = vstv %s302
        %v304 = vmul.f32 %v303, %v289
        %v305 = vmul.f32 %v303, %v290
        %v306 = vadd.f32 %v304, 0.0
        %v307 = vadd.f32 %v305, 0.0
        %s308 = scalar_lea.vmem [#allocation2], 1
        %v309 = vld [vmem:[%s308] ss:$4 sm:$0xf]
        %s310 = scalar_lea.vmem [#allocation2], 2
        %v311 = vld [vmem:[%s310] ss:$4 sm:$0xf]
        %s312 = scalar_lea.vmem [#allocation2], 3
        %v313 = vld [vmem:[%s312] ss:$4 sm:$0xf]
        %s314 = scalar_lea.vmem [#allocation2], 4
        %v315 = vld [vmem:[%s314] ss:$4 sm:$0xf]
        %v316 = vadd.f32 %v309, %v311
        %v317 = vmul.f32 %v316, 0.5
        %s318 = sld [smem:[#allocation3]]
        %v319 = vstv %s318
        %v320 = vmul.f32 %v319, %v317
        %s321 = sld [smem:[#allocation3 + $0x1]]
        %v322 = vstv %s321
        %v323 = vmul.f32 %v322, %v317
        %325 = vrot.lane.b32.xlu0 %v323, 127
        %v326 = vpop.permute.xlu0 %325
        %v328 = vadd.f32 %v320, %v326
        %s329 = sld [smem:[#allocation3 + $0x2]]
        %v330 = vstv %s329
        %v331 = vmul.f32 %v330, %v317
        %333 = vrot.lane.b32.xlu0 %v331, 126
        %v334 = vpop.permute.xlu0 %333
        %v336 = vadd.f32 %v328, %v334
        %v337 = vadd.f32 %v311, %v313
        %v338 = vmul.f32 %v337, 0.5
        %s339 = sld [smem:[#allocation3 + $0x3]]
        %v340 = vstv %s339
        %v341 = vmul.f32 %v340, %v338
        %v342 = vadd.f32 %v336, %v341
        %s343 = sld [smem:[#allocation3 + $0x4]]
        %v344 = vstv %s343
        %v345 = vmul.f32 %v344, %v338
        %347 = vrot.lane.b32.xlu0 %v345, 127
        %v348 = vpop.permute.xlu0 %347
        %v350 = vadd.f32 %v342, %v348
        %s351 = sld [smem:[#allocation3 + $0x5]]
        %v352 = vstv %s351
        %v353 = vmul.f32 %v352, %v338
        %355 = vrot.lane.b32.xlu0 %v353, 126
        %v356 = vpop.permute.xlu0 %355
        %v358 = vadd.f32 %v350, %v356
        %v359 = vadd.f32 %v313, %v315
        %v360 = vmul.f32 %v359, 0.5
        %s361 = sld [smem:[#allocation3 + $0x6]]
        %v362 = vstv %s361
        %v363 = vmul.f32 %v362, %v360
        %v364 = vadd.f32 %v358, %v363
        %s365 = sld [smem:[#allocation3 + $0x7]]
        %v366 = vstv %s365
        %v367 = vmul.f32 %v366, %v360
        %369 = vrot.lane.b32.xlu0 %v367, 127
        %v370 = vpop.permute.xlu0 %369
        %v372 = vadd.f32 %v364, %v370
        %s373 = sld [smem:[#allocation3 + $0x8]]
        %v374 = vstv %s373
        %v375 = vmul.f32 %v374, %v360
        %377 = vrot.lane.b32.xlu0 %v375, 126
        %v378 = vpop.permute.xlu0 %377
        %v380 = vadd.f32 %v372, %v378
        %v381 = vpack.c.bf16 %v380, %v380
        %v382 = vunpack.c.l.bf16 %v381
        %v383 = vsub.f32 %v380, %v382
        %v384 = vpack.c.bf16 %v383, %v383
        %v387 = vunpack.c.l.b16 %v287
        %v388 = vunpack.c.l.b16 %v288
        %v389 = vpack.c.b16 %v388, %v387
        %vm391 = vcmask 130048
        %v393 = vsel %vm391, %v384, 0
        %395 = vmatprep.subr.bf16.mxu0 0
        %396 = vmatpush1.bf16.msra.mxu0 %v389
        %397 = vmatprep.subr.bf16.mxu0 0
        %398 = vmatpush1.bf16.msra.mxu0 0
        %399 = vmatprep.subr.bf16.mxu0 0
        %400 = vmatpush1.bf16.msra.mxu0 0
        %401 = vmatprep.subr.bf16.mxu0 0
        %402 = vmatpush1.bf16.msra.mxu0 0
        %403 = vmatprep.subr.bf16.mxu0 0
        %404 = vmatpush1.bf16.msra.mxu0 0
        %405 = vmatprep.subr.bf16.mxu0 0
        %406 = vmatpush1.bf16.msra.mxu0 0
        %407 = vmatprep.subr.bf16.mxu0 0
        %408 = vmatpush1.bf16.msra.mxu0 0
        %409 = vmatprep.subr.bf16.mxu0 0
        %410 = vmatpush1.bf16.msra.mxu0 0
        %411 = vmatprep.subr.bf16.mxu0 0
        %412 = vmatpush1.bf16.msra.mxu0 0
        %413 = vmatprep.subr.bf16.mxu0 0
        %414 = vmatpush1.bf16.msra.mxu0 0
        %415 = vmatprep.subr.bf16.mxu0 0
        %416 = vmatpush1.bf16.msra.mxu0 0
        %417 = vmatprep.subr.bf16.mxu0 0
        %418 = vmatpush1.bf16.msra.mxu0 0
        %419 = vmatprep.subr.bf16.mxu0 0
        %420 = vmatpush1.bf16.msra.mxu0 0
        %421 = vmatprep.subr.bf16.mxu0 0
        %422 = vmatpush1.bf16.msra.mxu0 0
        %423 = vmatprep.subr.bf16.mxu0 0
        %424 = vmatpush1.bf16.msra.mxu0 0
        %425 = vmatprep.subr.bf16.mxu0 0
        %426 = vmatpush1.bf16.msra.mxu0 0
        %427 = vmatprep.mubr.bf16.mxu0 0
        %428 = vmatmul.mubr.bf16.gmra.mrb[0].mxu0 %v393
        %v429 = vpop.f32.mrb[0].mxu0
        %v430 = vadd.f32 0.0, %v429
        %v431 = vpop.f32.mrb[0].mxu0
        %v432 = vpop.f32.mrb[0].mxu0
        %v433 = vpop.f32.mrb[0].mxu0
        %434 = vdwg.mxu0
        %v436 = vsel %vm391, %v381, 0
        %438 = vmatprep.subr.bf16.mxu0 0
        %439 = vmatpush1.bf16.msra.mxu0 %v389
        %440 = vmatprep.subr.bf16.mxu0 0
        %441 = vmatpush1.bf16.msra.mxu0 0
        %442 = vmatprep.subr.bf16.mxu0 0
        %443 = vmatpush1.bf16.msra.mxu0 0
        %444 = vmatprep.subr.bf16.mxu0 0
        %445 = vmatpush1.bf16.msra.mxu0 0
        %446 = vmatprep.subr.bf16.mxu0 0
        %447 = vmatpush1.bf16.msra.mxu0 0
        %448 = vmatprep.subr.bf16.mxu0 0
        %449 = vmatpush1.bf16.msra.mxu0 0
        %450 = vmatprep.subr.bf16.mxu0 0
        %451 = vmatpush1.bf16.msra.mxu0 0
        %452 = vmatprep.subr.bf16.mxu0 0
        %453 = vmatpush1.bf16.msra.mxu0 0
        %454 = vmatprep.subr.bf16.mxu0 0
        %455 = vmatpush1.bf16.msra.mxu0 0
        %456 = vmatprep.subr.bf16.mxu0 0
        %457 = vmatpush1.bf16.msra.mxu0 0
        %458 = vmatprep.subr.bf16.mxu0 0
        %459 = vmatpush1.bf16.msra.mxu0 0
        %460 = vmatprep.subr.bf16.mxu0 0
        %461 = vmatpush1.bf16.msra.mxu0 0
        %462 = vmatprep.subr.bf16.mxu0 0
        %463 = vmatpush1.bf16.msra.mxu0 0
        %464 = vmatprep.subr.bf16.mxu0 0
        %465 = vmatpush1.bf16.msra.mxu0 0
        %466 = vmatprep.subr.bf16.mxu0 0
        %467 = vmatpush1.bf16.msra.mxu0 0
        %468 = vmatprep.subr.bf16.mxu0 0
        %469 = vmatpush1.bf16.msra.mxu0 0
        %470 = vmatprep.mubr.bf16.mxu0 0
        %471 = vmatmul.mubr.bf16.gmra.mrb[0].mxu0 %v436
        %v472 = vpop.f32.mrb[0].mxu0
        %v473 = vadd.f32 %v430, %v472
        %v474 = vpop.f32.mrb[0].mxu0
        %v475 = vpop.f32.mrb[0].mxu0
        %v476 = vpop.f32.mrb[0].mxu0
        %477 = vdwg.mxu0
        %vm478 = vcmask 27648
        %479 = vst.msk [vmem:[%s273] sm:$0xf] %vm478, %v473
        %s480 = scalar_lea.vmem %s248, 16 [#allocation9]
        %v481 = vld [vmem:[%s480] sm:$0xff]
        %v482 = vld [vmem:[%s480 + $0x8] sm:$0xff]
        %485 = vrot.lane.b32.xlu0 %v481, 1
        %v486 = vpop.permute.xlu0 %485
        %487 = vrot.lane.b32.xlu0 %v482, 1
        %v488 = vpop.permute.xlu0 %487
        %491 = vst.msk [vmem:[#allocation2 + $0x1] sm:$0xff] %vm299, %v486
        %492 = vst.msk [vmem:[#allocation2 + $0x9] sm:$0xff] %vm299, %v488
        %s493 = sld [smem:[#allocation7 + $0x1]]
        %v494 = vstv %s493
        %v495 = vmul.f32 %v494, %v481
        %v496 = vmul.f32 %v494, %v482
        %v497 = vadd.f32 %v306, %v495
        %v498 = vadd.f32 %v307, %v496
        %v499 = vld [vmem:[%s308] ss:$4 sm:$0xf]
        %v500 = vld [vmem:[%s310] ss:$4 sm:$0xf]
        %v501 = vld [vmem:[%s312] ss:$4 sm:$0xf]
        %v502 = vld [vmem:[%s314] ss:$4 sm:$0xf]
        %v503 = vadd.f32 %v499, %v500
        %v504 = vmul.f32 %v503, 0.5
        %s505 = sld [smem:[#allocation3 + $0x9]]
        %v506 = vstv %s505
        %v507 = vmul.f32 %v506, %v504
        %s508 = sld [smem:[#allocation3 + $0xa]]
        %v509 = vstv %s508
        %v510 = vmul.f32 %v509, %v504
        %512 = vrot.lane.b32.xlu0 %v510, 127
        %v513 = vpop.permute.xlu0 %512
        %v515 = vadd.f32 %v507, %v513
        %s516 = sld [smem:[#allocation3 + $0xb]]
        %v517 = vstv %s516
        %v518 = vmul.f32 %v517, %v504
        %520 = vrot.lane.b32.xlu0 %v518, 126
        %v521 = vpop.permute.xlu0 %520
        %v523 = vadd.f32 %v515, %v521
        %v524 = vadd.f32 %v500, %v501
        %v525 = vmul.f32 %v524, 0.5
        %s526 = sld [smem:[#allocation3 + $0xc]]
        %v527 = vstv %s526
        %v528 = vmul.f32 %v527, %v525
        %v529 = vadd.f32 %v523, %v528
        %s530 = sld [smem:[#allocation3 + $0xd]]
        %v531 = vstv %s530
        %v532 = vmul.f32 %v531, %v525
        %534 = vrot.lane.b32.xlu0 %v532, 127
        %v535 = vpop.permute.xlu0 %534
        %v537 = vadd.f32 %v529, %v535
        %s538 = sld [smem:[#allocation3 + $0xe]]
        %v539 = vstv %s538
        %v540 = vmul.f32 %v539, %v525
        %542 = vrot.lane.b32.xlu0 %v540, 126
        %v543 = vpop.permute.xlu0 %542
        %v545 = vadd.f32 %v537, %v543
        %v546 = vadd.f32 %v501, %v502
        %v547 = vmul.f32 %v546, 0.5
        %s548 = sld [smem:[#allocation3 + $0xf]]
        %v549 = vstv %s548
        %v550 = vmul.f32 %v549, %v547
        %v551 = vadd.f32 %v545, %v550
        %s552 = sld [smem:[#allocation3 + $0x10]]
        %v553 = vstv %s552
        %v554 = vmul.f32 %v553, %v547
        %556 = vrot.lane.b32.xlu0 %v554, 127
        %v557 = vpop.permute.xlu0 %556
        %v559 = vadd.f32 %v551, %v557
        %s560 = sld [smem:[#allocation3 + $0x11]]
        %v561 = vstv %s560
        %v562 = vmul.f32 %v561, %v547
        %564 = vrot.lane.b32.xlu0 %v562, 126
        %v565 = vpop.permute.xlu0 %564
        %v567 = vadd.f32 %v559, %v565
        %v568 = vpack.c.bf16 %v567, %v567
        %v569 = vunpack.c.l.bf16 %v568
        %v570 = vsub.f32 %v567, %v569
        %v571 = vpack.c.bf16 %v570, %v570
        %v573 = vsel %vm391, %v571, 0
        %575 = vmatprep.subr.bf16.mxu0 0
        %576 = vmatpush1.bf16.msra.mxu0 %v389
        %577 = vmatprep.subr.bf16.mxu0 0
        %578 = vmatpush1.bf16.msra.mxu0 0
        %579 = vmatprep.subr.bf16.mxu0 0
        %580 = vmatpush1.bf16.msra.mxu0 0
        %581 = vmatprep.subr.bf16.mxu0 0
        %582 = vmatpush1.bf16.msra.mxu0 0
        %583 = vmatprep.subr.bf16.mxu0 0
        %584 = vmatpush1.bf16.msra.mxu0 0
        %585 = vmatprep.subr.bf16.mxu0 0
        %586 = vmatpush1.bf16.msra.mxu0 0
        %587 = vmatprep.subr.bf16.mxu0 0
        %588 = vmatpush1.bf16.msra.mxu0 0
        %589 = vmatprep.subr.bf16.mxu0 0
        %590 = vmatpush1.bf16.msra.mxu0 0
        %591 = vmatprep.subr.bf16.mxu0 0
        %592 = vmatpush1.bf16.msra.mxu0 0
        %593 = vmatprep.subr.bf16.mxu0 0
        %594 = vmatpush1.bf16.msra.mxu0 0
        %595 = vmatprep.subr.bf16.mxu0 0
        %596 = vmatpush1.bf16.msra.mxu0 0
        %597 = vmatprep.subr.bf16.mxu0 0
        %598 = vmatpush1.bf16.msra.mxu0 0
        %599 = vmatprep.subr.bf16.mxu0 0
        %600 = vmatpush1.bf16.msra.mxu0 0
        %601 = vmatprep.subr.bf16.mxu0 0
        %602 = vmatpush1.bf16.msra.mxu0 0
        %603 = vmatprep.subr.bf16.mxu0 0
        %604 = vmatpush1.bf16.msra.mxu0 0
        %605 = vmatprep.subr.bf16.mxu0 0
        %606 = vmatpush1.bf16.msra.mxu0 0
        %607 = vmatprep.mubr.bf16.mxu0 0
        %608 = vmatmul.mubr.bf16.gmra.mrb[0].mxu0 %v573
        %v609 = vpop.f32.mrb[0].mxu0
        %v610 = vadd.f32 0.0, %v609
        %v611 = vpop.f32.mrb[0].mxu0
        %v612 = vpop.f32.mrb[0].mxu0
        %v613 = vpop.f32.mrb[0].mxu0
        %614 = vdwg.mxu0
        %v616 = vsel %vm391, %v568, 0
        %618 = vmatprep.subr.bf16.mxu0 0
        %619 = vmatpush1.bf16.msra.mxu0 %v389
        %620 = vmatprep.subr.bf16.mxu0 0
        %621 = vmatpush1.bf16.msra.mxu0 0
        %622 = vmatprep.subr.bf16.mxu0 0
        %623 = vmatpush1.bf16.msra.mxu0 0
        %624 = vmatprep.subr.bf16.mxu0 0
        %625 = vmatpush1.bf16.msra.mxu0 0
        %626 = vmatprep.subr.bf16.mxu0 0
        %627 = vmatpush1.bf16.msra.mxu0 0
        %628 = vmatprep.subr.bf16.mxu0 0
        %629 = vmatpush1.bf16.msra.mxu0 0
        %630 = vmatprep.subr.bf16.mxu0 0
        %631 = vmatpush1.bf16.msra.mxu0 0
        %632 = vmatprep.subr.bf16.mxu0 0
        %633 = vmatpush1.bf16.msra.mxu0 0
        %634 = vmatprep.subr.bf16.mxu0 0
        %635 = vmatpush1.bf16.msra.mxu0 0
        %636 = vmatprep.subr.bf16.mxu0 0
        %637 = vmatpush1.bf16.msra.mxu0 0
        %638 = vmatprep.subr.bf16.mxu0 0
        %639 = vmatpush1.bf16.msra.mxu0 0
        %640 = vmatprep.subr.bf16.mxu0 0
        %641 = vmatpush1.bf16.msra.mxu0 0
        %642 = vmatprep.subr.bf16.mxu0 0
        %643 = vmatpush1.bf16.msra.mxu0 0
        %644 = vmatprep.subr.bf16.mxu0 0
        %645 = vmatpush1.bf16.msra.mxu0 0
        %646 = vmatprep.subr.bf16.mxu0 0
        %647 = vmatpush1.bf16.msra.mxu0 0
        %648 = vmatprep.subr.bf16.mxu0 0
        %649 = vmatpush1.bf16.msra.mxu0 0
        %650 = vmatprep.mubr.bf16.mxu0 0
        %651 = vmatmul.mubr.bf16.gmra.mrb[0].mxu0 %v616
        %v652 = vpop.f32.mrb[0].mxu0
        %v653 = vadd.f32 %v610, %v652
        %v654 = vpop.f32.mrb[0].mxu0
        %v655 = vpop.f32.mrb[0].mxu0
        %v656 = vpop.f32.mrb[0].mxu0
        %657 = vdwg.mxu0
        %s658 = scalar_lea.vmem %s273, 4 [#allocation10]
        %659 = vst.msk [vmem:[%s658] sm:$0xf] %vm478, %v653
        %s660 = scalar_lea.vmem %s248, 32 [#allocation9]
        %v661 = vld [vmem:[%s660] sm:$0xff]
        %v662 = vld [vmem:[%s660 + $0x8] sm:$0xff]
        %665 = vrot.lane.b32.xlu0 %v661, 1
        %v666 = vpop.permute.xlu0 %665
        %667 = vrot.lane.b32.xlu0 %v662, 1
        %v668 = vpop.permute.xlu0 %667
        %671 = vst.msk [vmem:[#allocation2 + $0x1] sm:$0xff] %vm299, %v666
        %672 = vst.msk [vmem:[#allocation2 + $0x9] sm:$0xff] %vm299, %v668
        %s673 = sld [smem:[#allocation7 + $0x2]]
        %v674 = vstv %s673
        %v675 = vmul.f32 %v674, %v661
        %v676 = vmul.f32 %v674, %v662
        %v677 = vadd.f32 %v497, %v675
        %v678 = vadd.f32 %v498, %v676
        %v679 = vld [vmem:[%s308] ss:$4 sm:$0xf]
        %v680 = vld [vmem:[%s310] ss:$4 sm:$0xf]
        %v681 = vld [vmem:[%s312] ss:$4 sm:$0xf]
        %v682 = vld [vmem:[%s314] ss:$4 sm:$0xf]
        %v683 = vadd.f32 %v679, %v680
        %v684 = vmul.f32 %v683, 0.5
        %s685 = sld [smem:[#allocation3 + $0x12]]
        %v686 = vstv %s685
        %v687 = vmul.f32 %v686, %v684
        %s688 = sld [smem:[#allocation3 + $0x13]]
        %v689 = vstv %s688
        %v690 = vmul.f32 %v689, %v684
        %692 = vrot.lane.b32.xlu0 %v690, 127
        %v693 = vpop.permute.xlu0 %692
        %v695 = vadd.f32 %v687, %v693
        %s696 = sld [smem:[#allocation3 + $0x14]]
        %v697 = vstv %s696
        %v698 = vmul.f32 %v697, %v684
        %700 = vrot.lane.b32.xlu0 %v698, 126
        %v701 = vpop.permute.xlu0 %700
        %v703 = vadd.f32 %v695, %v701
        %v704 = vadd.f32 %v680, %v681
        %v705 = vmul.f32 %v704, 0.5
        %s706 = sld [smem:[#allocation3 + $0x15]]
        %v707 = vstv %s706
        %v708 = vmul.f32 %v707, %v705
        %v709 = vadd.f32 %v703, %v708
        %s710 = sld [smem:[#allocation3 + $0x16]]
        %v711 = vstv %s710
        %v712 = vmul.f32 %v711, %v705
        %714 = vrot.lane.b32.xlu0 %v712, 127
        %v715 = vpop.permute.xlu0 %714
        %v717 = vadd.f32 %v709, %v715
        %s718 = sld [smem:[#allocation3 + $0x17]]
        %v719 = vstv %s718
        %v720 = vmul.f32 %v719, %v705
        %722 = vrot.lane.b32.xlu0 %v720, 126
        %v723 = vpop.permute.xlu0 %722
        %v725 = vadd.f32 %v717, %v723
        %v726 = vadd.f32 %v681, %v682
        %v727 = vmul.f32 %v726, 0.5
        %s728 = sld [smem:[#allocation3 + $0x18]]
        %v729 = vstv %s728
        %v730 = vmul.f32 %v729, %v727
        %v731 = vadd.f32 %v725, %v730
        %s732 = sld [smem:[#allocation3 + $0x19]]
        %v733 = vstv %s732
        %v734 = vmul.f32 %v733, %v727
        %736 = vrot.lane.b32.xlu0 %v734, 127
        %v737 = vpop.permute.xlu0 %736
        %v739 = vadd.f32 %v731, %v737
        %s740 = sld [smem:[#allocation3 + $0x1a]]
        %v741 = vstv %s740
        %v742 = vmul.f32 %v741, %v727
        %744 = vrot.lane.b32.xlu0 %v742, 126
        %v745 = vpop.permute.xlu0 %744
        %v747 = vadd.f32 %v739, %v745
        %v748 = vpack.c.bf16 %v747, %v747
        %v749 = vunpack.c.l.bf16 %v748
        %v750 = vsub.f32 %v747, %v749
        %v751 = vpack.c.bf16 %v750, %v750
        %v753 = vsel %vm391, %v751, 0
        %755 = vmatprep.subr.bf16.mxu0 0
        %756 = vmatpush1.bf16.msra.mxu0 %v389
        %757 = vmatprep.subr.bf16.mxu0 0
        %758 = vmatpush1.bf16.msra.mxu0 0
        %759 = vmatprep.subr.bf16.mxu0 0
        %760 = vmatpush1.bf16.msra.mxu0 0
        %761 = vmatprep.subr.bf16.mxu0 0
        %762 = vmatpush1.bf16.msra.mxu0 0
        %763 = vmatprep.subr.bf16.mxu0 0
        %764 = vmatpush1.bf16.msra.mxu0 0
        %765 = vmatprep.subr.bf16.mxu0 0
        %766 = vmatpush1.bf16.msra.mxu0 0
        %767 = vmatprep.subr.bf16.mxu0 0
        %768 = vmatpush1.bf16.msra.mxu0 0
        %769 = vmatprep.subr.bf16.mxu0 0
        %770 = vmatpush1.bf16.msra.mxu0 0
        %771 = vmatprep.subr.bf16.mxu0 0
        %772 = vmatpush1.bf16.msra.mxu0 0
        %773 = vmatprep.subr.bf16.mxu0 0
        %774 = vmatpush1.bf16.msra.mxu0 0
        %775 = vmatprep.subr.bf16.mxu0 0
        %776 = vmatpush1.bf16.msra.mxu0 0
        %777 = vmatprep.subr.bf16.mxu0 0
        %778 = vmatpush1.bf16.msra.mxu0 0
        %779 = vmatprep.subr.bf16.mxu0 0
        %780 = vmatpush1.bf16.msra.mxu0 0
        %781 = vmatprep.subr.bf16.mxu0 0
        %782 = vmatpush1.bf16.msra.mxu0 0
        %783 = vmatprep.subr.bf16.mxu0 0
        %784 = vmatpush1.bf16.msra.mxu0 0
        %785 = vmatprep.subr.bf16.mxu0 0
        %786 = vmatpush1.bf16.msra.mxu0 0
        %787 = vmatprep.mubr.bf16.mxu0 0
        %788 = vmatmul.mubr.bf16.gmra.mrb[0].mxu0 %v753
        %v789 = vpop.f32.mrb[0].mxu0
        %v790 = vadd.f32 0.0, %v789
        %v791 = vpop.f32.mrb[0].mxu0
        %v792 = vpop.f32.mrb[0].mxu0
        %v793 = vpop.f32.mrb[0].mxu0
        %794 = vdwg.mxu0
        %v796 = vsel %vm391, %v748, 0
        %798 = vmatprep.subr.bf16.mxu0 0
        %799 = vmatpush1.bf16.msra.mxu0 %v389
        %800 = vmatprep.subr.bf16.mxu0 0
        %801 = vmatpush1.bf16.msra.mxu0 0
        %802 = vmatprep.subr.bf16.mxu0 0
        %803 = vmatpush1.bf16.msra.mxu0 0
        %804 = vmatprep.subr.bf16.mxu0 0
        %805 = vmatpush1.bf16.msra.mxu0 0
        %806 = vmatprep.subr.bf16.mxu0 0
        %807 = vmatpush1.bf16.msra.mxu0 0
        %808 = vmatprep.subr.bf16.mxu0 0
        %809 = vmatpush1.bf16.msra.mxu0 0
        %810 = vmatprep.subr.bf16.mxu0 0
        %811 = vmatpush1.bf16.msra.mxu0 0
        %812 = vmatprep.subr.bf16.mxu0 0
        %813 = vmatpush1.bf16.msra.mxu0 0
        %814 = vmatprep.subr.bf16.mxu0 0
        %815 = vmatpush1.bf16.msra.mxu0 0
        %816 = vmatprep.subr.bf16.mxu0 0
        %817 = vmatpush1.bf16.msra.mxu0 0
        %818 = vmatprep.subr.bf16.mxu0 0
        %819 = vmatpush1.bf16.msra.mxu0 0
        %820 = vmatprep.subr.bf16.mxu0 0
        %821 = vmatpush1.bf16.msra.mxu0 0
        %822 = vmatprep.subr.bf16.mxu0 0
        %823 = vmatpush1.bf16.msra.mxu0 0
        %824 = vmatprep.subr.bf16.mxu0 0
        %825 = vmatpush1.bf16.msra.mxu0 0
        %826 = vmatprep.subr.bf16.mxu0 0
        %827 = vmatpush1.bf16.msra.mxu0 0
        %828 = vmatprep.subr.bf16.mxu0 0
        %829 = vmatpush1.bf16.msra.mxu0 0
        %830 = vmatprep.mubr.bf16.mxu0 0
        %831 = vmatmul.mubr.bf16.gmra.mrb[0].mxu0 %v796
        %v832 = vpop.f32.mrb[0].mxu0
        %v833 = vadd.f32 %v790, %v832
        %v834 = vpop.f32.mrb[0].mxu0
        %v835 = vpop.f32.mrb[0].mxu0
        %v836 = vpop.f32.mrb[0].mxu0
        %837 = vdwg.mxu0
        %s838 = scalar_lea.vmem %s273, 8 [#allocation10]
        %839 = vst.msk [vmem:[%s838] sm:$0xf] %vm478, %v833
        %s840 = scalar_lea.vmem %s248, 48 [#allocation9]
        %v841 = vld [vmem:[%s840] sm:$0xff]
        %v842 = vld [vmem:[%s840 + $0x8] sm:$0xff]
        %845 = vrot.lane.b32.xlu0 %v841, 1
        %v846 = vpop.permute.xlu0 %845
        %847 = vrot.lane.b32.xlu0 %v842, 1
        %v848 = vpop.permute.xlu0 %847
        %851 = vst.msk [vmem:[#allocation2 + $0x1] sm:$0xff] %vm299, %v846
        %852 = vst.msk [vmem:[#allocation2 + $0x9] sm:$0xff] %vm299, %v848
        %s853 = sld [smem:[#allocation7 + $0x3]]
        %v854 = vstv %s853
        %v855 = vmul.f32 %v854, %v841
        %v856 = vmul.f32 %v854, %v842
        %v857 = vadd.f32 %v677, %v855
        %v858 = vadd.f32 %v678, %v856
        %v859 = vld [vmem:[%s308] ss:$4 sm:$0xf]
        %v860 = vld [vmem:[%s310] ss:$4 sm:$0xf]
        %v861 = vld [vmem:[%s312] ss:$4 sm:$0xf]
        %v862 = vld [vmem:[%s314] ss:$4 sm:$0xf]
        %v863 = vadd.f32 %v859, %v860
        %v864 = vmul.f32 %v863, 0.5
        %s865 = sld [smem:[#allocation3 + $0x1b]]
        %v866 = vstv %s865
        %v867 = vmul.f32 %v866, %v864
        %s868 = sld [smem:[#allocation3 + $0x1c]]
        %v869 = vstv %s868
        %v870 = vmul.f32 %v869, %v864
        %872 = vrot.lane.b32.xlu0 %v870, 127
        %v873 = vpop.permute.xlu0 %872
        %v875 = vadd.f32 %v867, %v873
        %s876 = sld [smem:[#allocation3 + $0x1d]]
        %v877 = vstv %s876
        %v878 = vmul.f32 %v877, %v864
        %880 = vrot.lane.b32.xlu0 %v878, 126
        %v881 = vpop.permute.xlu0 %880
        %v883 = vadd.f32 %v875, %v881
        %v884 = vadd.f32 %v860, %v861
        %v885 = vmul.f32 %v884, 0.5
        %s886 = sld [smem:[#allocation3 + $0x1e]]
        %v887 = vstv %s886
        %v888 = vmul.f32 %v887, %v885
        %v889 = vadd.f32 %v883, %v888
        %s890 = sld [smem:[#allocation3 + $0x1f]]
        %v891 = vstv %s890
        %v892 = vmul.f32 %v891, %v885
        %894 = vrot.lane.b32.xlu0 %v892, 127
        %v895 = vpop.permute.xlu0 %894
        %v897 = vadd.f32 %v889, %v895
        %s898 = sld [smem:[#allocation3 + $0x20]]
        %v899 = vstv %s898
        %v900 = vmul.f32 %v899, %v885
        %902 = vrot.lane.b32.xlu0 %v900, 126
        %v903 = vpop.permute.xlu0 %902
        %v905 = vadd.f32 %v897, %v903
        %v906 = vadd.f32 %v861, %v862
        %v907 = vmul.f32 %v906, 0.5
        %s908 = sld [smem:[#allocation3 + $0x21]]
        %v909 = vstv %s908
        %v910 = vmul.f32 %v909, %v907
        %v911 = vadd.f32 %v905, %v910
        %s912 = sld [smem:[#allocation3 + $0x22]]
        %v913 = vstv %s912
        %v914 = vmul.f32 %v913, %v907
        %916 = vrot.lane.b32.xlu0 %v914, 127
        %v917 = vpop.permute.xlu0 %916
        %v919 = vadd.f32 %v911, %v917
        %s920 = sld [smem:[#allocation3 + $0x23]]
        %v921 = vstv %s920
        %v922 = vmul.f32 %v921, %v907
        %924 = vrot.lane.b32.xlu0 %v922, 126
        %v925 = vpop.permute.xlu0 %924
        %v927 = vadd.f32 %v919, %v925
        %v928 = vpack.c.bf16 %v927, %v927
        %v929 = vunpack.c.l.bf16 %v928
        %v930 = vsub.f32 %v927, %v929
        %v931 = vpack.c.bf16 %v930, %v930
        %v933 = vsel %vm391, %v931, 0
        %935 = vmatprep.subr.bf16.mxu0 0
        %936 = vmatpush1.bf16.msra.mxu0 %v389
        %937 = vmatprep.subr.bf16.mxu0 0
        %938 = vmatpush1.bf16.msra.mxu0 0
        %939 = vmatprep.subr.bf16.mxu0 0
        %940 = vmatpush1.bf16.msra.mxu0 0
        %941 = vmatprep.subr.bf16.mxu0 0
        %942 = vmatpush1.bf16.msra.mxu0 0
        %943 = vmatprep.subr.bf16.mxu0 0
        %944 = vmatpush1.bf16.msra.mxu0 0
        %945 = vmatprep.subr.bf16.mxu0 0
        %946 = vmatpush1.bf16.msra.mxu0 0
        %947 = vmatprep.subr.bf16.mxu0 0
        %948 = vmatpush1.bf16.msra.mxu0 0
        %949 = vmatprep.subr.bf16.mxu0 0
        %950 = vmatpush1.bf16.msra.mxu0 0
        %951 = vmatprep.subr.bf16.mxu0 0
        %952 = vmatpush1.bf16.msra.mxu0 0
        %953 = vmatprep.subr.bf16.mxu0 0
        %954 = vmatpush1.bf16.msra.mxu0 0
        %955 = vmatprep.subr.bf16.mxu0 0
        %956 = vmatpush1.bf16.msra.mxu0 0
        %957 = vmatprep.subr.bf16.mxu0 0
        %958 = vmatpush1.bf16.msra.mxu0 0
        %959 = vmatprep.subr.bf16.mxu0 0
        %960 = vmatpush1.bf16.msra.mxu0 0
        %961 = vmatprep.subr.bf16.mxu0 0
        %962 = vmatpush1.bf16.msra.mxu0 0
        %963 = vmatprep.subr.bf16.mxu0 0
        %964 = vmatpush1.bf16.msra.mxu0 0
        %965 = vmatprep.subr.bf16.mxu0 0
        %966 = vmatpush1.bf16.msra.mxu0 0
        %967 = vmatprep.mubr.bf16.mxu0 0
        %968 = vmatmul.mubr.bf16.gmra.mrb[0].mxu0 %v933
        %v969 = vpop.f32.mrb[0].mxu0
        %v970 = vadd.f32 0.0, %v969
        %v971 = vpop.f32.mrb[0].mxu0
        %v972 = vpop.f32.mrb[0].mxu0
        %v973 = vpop.f32.mrb[0].mxu0
        %974 = vdwg.mxu0
        %v976 = vsel %vm391, %v928, 0
        %978 = vmatprep.subr.bf16.mxu0 0
        %979 = vmatpush1.bf16.msra.mxu0 %v389
        %980 = vmatprep.subr.bf16.mxu0 0
        %981 = vmatpush1.bf16.msra.mxu0 0
        %982 = vmatprep.subr.bf16.mxu0 0
        %983 = vmatpush1.bf16.msra.mxu0 0
        %984 = vmatprep.subr.bf16.mxu0 0
        %985 = vmatpush1.bf16.msra.mxu0 0
        %986 = vmatprep.subr.bf16.mxu0 0
        %987 = vmatpush1.bf16.msra.mxu0 0
        %988 = vmatprep.subr.bf16.mxu0 0
        %989 = vmatpush1.bf16.msra.mxu0 0
        %990 = vmatprep.subr.bf16.mxu0 0
        %991 = vmatpush1.bf16.msra.mxu0 0
        %992 = vmatprep.subr.bf16.mxu0 0
        %993 = vmatpush1.bf16.msra.mxu0 0
        %994 = vmatprep.subr.bf16.mxu0 0
        %995 = vmatpush1.bf16.msra.mxu0 0
        %996 = vmatprep.subr.bf16.mxu0 0
        %997 = vmatpush1.bf16.msra.mxu0 0
        %998 = vmatprep.subr.bf16.mxu0 0
        %999 = vmatpush1.bf16.msra.mxu0 0
        %1000 = vmatprep.subr.bf16.mxu0 0
        %1001 = vmatpush1.bf16.msra.mxu0 0
        %1002 = vmatprep.subr.bf16.mxu0 0
        %1003 = vmatpush1.bf16.msra.mxu0 0
        %1004 = vmatprep.subr.bf16.mxu0 0
        %1005 = vmatpush1.bf16.msra.mxu0 0
        %1006 = vmatprep.subr.bf16.mxu0 0
        %1007 = vmatpush1.bf16.msra.mxu0 0
        %1008 = vmatprep.subr.bf16.mxu0 0
        %1009 = vmatpush1.bf16.msra.mxu0 0
        %1010 = vmatprep.mubr.bf16.mxu0 0
        %1011 = vmatmul.mubr.bf16.gmra.mrb[0].mxu0 %v976
        %v1012 = vpop.f32.mrb[0].mxu0
        %v1013 = vadd.f32 %v970, %v1012
        %v1014 = vpop.f32.mrb[0].mxu0
        %v1015 = vpop.f32.mrb[0].mxu0
        %v1016 = vpop.f32.mrb[0].mxu0
        %1017 = vdwg.mxu0
        %s1018 = scalar_lea.vmem %s273, 12 [#allocation10]
        %1019 = vst.msk [vmem:[%s1018] sm:$0xf] %vm478, %v1013
        %1020 = vst.msk [vmem:[%s280] sm:$0xff] %vm391, %v857
        %1021 = vst.msk [vmem:[%s280 + $0x8] sm:$0xff] %vm391, %v858
        %s1022 = sand.u32 %s125, 1
        %s1023 = scalar_lea.sflag [#allocation5], %s1022
        %s1024 = sand.u32 %s125, 1
        %s1025 = smul.addr %s1024, 16
        %s1026 = scalar_lea.vmem [#allocation10], %s1025
        %s1027 = sand.u32 %s151, 1
        %s1028 = scalar_lea.sflag [#allocation12], %s1027
        %s1029 = sand.u32 %s151, 1
        %s1030 = smul.addr %s1029, 16
        %s1031 = scalar_lea.vmem [#allocation11], %s1030
        // Predicated region
        $region49: #{rec_convnet_forward.1} parent=35 // pred_check
          %p1032 = pneg %p135
        $region50: #{rec_convnet_forward.1} parent=35 // pred_check_branch
          %1034 = sbr.rel (%p1032) target = $region52
        $region51: #{rec_convnet_forward.1} parent=35 // pred_region
          %s1036 = ssub.s32 256, 256
          %1037 = vsyncadd %s1023, %s1036
          %s1038 = smul.addr %s28, 4
          %s1039 = smul.addr %s1038, 64
          %s1040 = scalar_lea.hbm %s4, %s1039
          %s1041 = sshll.u32 %s1026, 4
          %s1042 = int_to_ptr.vmem [resolvable:$true] %s1041
          %1047 = dma.vmem_to_hbm [thread:$0]  %s1042, 256, %s1040, %s1023, 64, 64, 4
        $region52: #{rec_convnet_forward.1} parent=35 // pred_fallthru
          _
        // Predicated region
        $region53: #{rec_convnet_forward.1} parent=35 // pred_check
          %p1048 = pneg %p161
        $region54: #{rec_convnet_forward.1} parent=35 // pred_check_branch
          %1050 = sbr.rel (%p1048) target = $region56
        $region55: #{rec_convnet_forward.1} parent=35 // pred_region
          %s1052 = ssub.s32 256, 256
          %1053 = vsyncadd %s1028, %s1052
          %s1054 = smul.addr %s28, 2
          %s1055 = smul.addr %s1054, 128
          %s1056 = scalar_lea.hbm %s5, %s1055
          %s1057 = sshll.u32 %s1031, 4
          %s1058 = int_to_ptr.vmem [resolvable:$true] %s1057
          %1063 = dma.vmem_to_hbm [thread:$0]  %s1058, 256, %s1056, %s1028, 128, 128, 8
        $region56: #{rec_convnet_forward.1} parent=35 // pred_fallthru
          _
      $region36: #{rec_convnet_forward.1} parent=5 // pred_fallthru
        _
      %p1064 = scmp.le.s32.totalorder 2, %s23
      // Predicated region
      $region57: #{rec_convnet_forward.1} parent=5 // pred_check
        %p1065 = pneg %p1064
      $region58: #{rec_convnet_forward.1} parent=5 // pred_check_branch
        %1067 = sbr.rel (%p1065) target = $region60
      $region59: #{rec_convnet_forward.1} parent=5 // pred_region
        %s1068 = ssub.s32 %s23, 2
        // Predicated region
        $region61: #{rec_convnet_forward.1} parent=59 // pred_check
          %p1069 = pneg %p141
        $region62: #{rec_convnet_forward.1} parent=59 // pred_check_branch
          %1071 = sbr.rel (%p1069) target = $region64
        $region63: #{rec_convnet_forward.1} parent=59 // pred_region
          %s1072 = sand.u32 %s126, 1
          %s1073 = scalar_lea.sflag [#allocation5], %s1072
          %s1074 = sand.u32 %s126, 1
          %s1075 = smul.addr %s1074, 16
          %s1076 = scalar_lea.vmem [#allocation10], %s1075
          %1077 = dma.done %s1073, 256
        $region64: #{rec_convnet_forward.1} parent=59 // pred_fallthru
          _
        // Predicated region
        $region65: #{rec_convnet_forward.1} parent=59 // pred_check
          %p1078 = pneg %p167
        $region66: #{rec_convnet_forward.1} parent=59 // pred_check_branch
          %1080 = sbr.rel (%p1078) target = $region68
        $region67: #{rec_convnet_forward.1} parent=59 // pred_region
          %s1081 = sand.u32 %s152, 1
          %s1082 = scalar_lea.sflag [#allocation12], %s1081
          %s1083 = sand.u32 %s152, 1
          %s1084 = smul.addr %s1083, 16
          %s1085 = scalar_lea.vmem [#allocation11], %s1084
          %1086 = dma.done %s1082, 256
        $region68: #{rec_convnet_forward.1} parent=59 // pred_fallthru
          _
      $region60: #{rec_convnet_forward.1} parent=5 // pred_fallthru
        _
    $region6: #{rec_convnet_forward.1} parent=1 // loop_footer
      %s27 = sadd.s32 1, %s23
    $region7: #{rec_convnet_forward.1} parent=1 // loop_footer_branch
      %22 = sbr.rel target = $region3
    $region8: #{rec_convnet_forward.1} parent=1 // loop_exit
      _
    %1087 = vsyncpa [#allocation4], 1
    %s1088 = scalar_lea.sflag [#allocation4], 1
    %1089 = vsyncpa %s1088, 1
    %1090 = vsyncpa [#allocation5], 1
    %s1091 = scalar_lea.sflag [#allocation5], 1
    %1092 = vsyncpa %s1091, 1
    %1093 = vsyncpa [#allocation12], 1
    %s1094 = scalar_lea.sflag [#allocation12], 1
    %1095 = vsyncpa %s1094, 1
    %1096 = vsyncpa [#allocation6], 1
    %s1097 = scalar_lea.sflag [#allocation6], 1
    %1098 = vsyncpa %s1097, 1
    %1099 = vsyncpa [#allocation8], 1

</llo_original>
